<compile_context>
chip_gen: v5e
topology: v5e:2x2
jax: 0.10.0
libtpu: 0.0.40
codegen_flags: <defaults>
</compile_context>

<pallas_src>
import functools
import math

import jax
import jax.numpy as jnp
import numpy as np
from jax import lax
from jax.experimental import pallas as pl
from jax.experimental.pallas import tpu as pltpu


def _encoder_layer_kernel(x_ref, w_in_ref, b_in_ref, w_o_ref, b_o_ref,
                          g1_ref, beta1_ref, w1_ref, bias1_ref,
                          w2_ref, bias2_ref, g2_ref, beta2_ref,
                          out_ref, *, nhead, eps):
    """One batch tile per grid step.

    x:    (S, Bt, D) f32      w_in: (D, 3D) bf16   b_in: (1, 3D) f32
    w_o:  (D, D) bf16         b_o:  (1, D)  f32
    g1/beta1, g2/beta2: (1, D) f32 LayerNorm affine params
    w1:   (D, F) bf16         bias1: (1, F) f32
    w2:   (F, D) bf16         bias2: (1, D) f32
    out:  (S, Bt, D) f32
    """
    S, Bt, D = x_ref.shape
    hd = D // nhead
    rows = S * Bt

    x = x_ref[...].reshape(rows, D)                # (rows, D) f32, rows = (s-major, b-minor)
    xb = x.astype(jnp.bfloat16)

    # Fused QKV projection (1/sqrt(head_dim) already folded into Q columns of w_in/b_in).
    qkv = jnp.dot(xb, w_in_ref[...], preferred_element_type=jnp.float32) + b_in_ref[...]
    qkv3 = qkv.reshape(S, Bt, 3 * D)

    w_o = w_o_ref[...]                              # (D, D) bf16, loaded once
    cols = []
    for b in range(Bt):
        attn_b = jnp.zeros((S, D), jnp.float32)
        for h in range(nhead):
            lo, hi = h * hd, (h + 1) * hd
            qh = qkv3[:, b, lo:hi].astype(jnp.bfloat16)                  # (S, hd)
            kh = qkv3[:, b, D + lo:D + hi].astype(jnp.bfloat16)          # (S, hd)
            vh = qkv3[:, b, 2 * D + lo:2 * D + hi].astype(jnp.bfloat16)  # (S, hd)

            s = jnp.dot(qh, kh.T, preferred_element_type=jnp.float32)    # (S, S) f32
            s = s - jnp.max(s, axis=-1, keepdims=True)
            p = jnp.exp(s)
            p = p * pl.reciprocal(jnp.sum(p, axis=-1, keepdims=True), approx=True)
            # TODO(synk): attention-weight dropout (self.dropout) is identity in eval mode.
            ctx = jnp.dot(p.astype(jnp.bfloat16), vh,
                          preferred_element_type=jnp.float32)             # (S, hd) f32
            # Output projection folded into the head loop (no scratch / narrow stores).
            attn_b = attn_b + jnp.dot(ctx.astype(jnp.bfloat16), w_o[lo:hi, :],
                                      preferred_element_type=jnp.float32)  # (S, D)
        cols.append(attn_b[:, None, :])
    attn3 = cols[0] if Bt == 1 else jnp.concatenate(cols, axis=1)        # (S, Bt, D)
    attn = attn3.reshape(rows, D) + b_o_ref[...]

    # Residual + LayerNorm1 (dropout1 identity in eval mode).
    h1 = x + attn
    mu1 = jnp.mean(h1, axis=-1, keepdims=True)
    var1 = jnp.mean((h1 - mu1) * (h1 - mu1), axis=-1, keepdims=True)
    h1 = (h1 - mu1) * lax.rsqrt(var1 + eps) * g1_ref[...] + beta1_ref[...]

    # Feed-forward: Linear -> ReLU -> Linear (inner dropout identity).
    f = jnp.dot(h1.astype(jnp.bfloat16), w1_ref[...],
                preferred_element_type=jnp.float32) + bias1_ref[...]
    f = jnp.maximum(f, 0.0)
    f = jnp.dot(f.astype(jnp.bfloat16), w2_ref[...],
                preferred_element_type=jnp.float32) + bias2_ref[...]

    # Residual + LayerNorm2 (dropout2 identity in eval mode).
    h2 = h1 + f
    mu2 = jnp.mean(h2, axis=-1, keepdims=True)
    var2 = jnp.mean((h2 - mu2) * (h2 - mu2), axis=-1, keepdims=True)
    y = (h2 - mu2) * lax.rsqrt(var2 + eps) * g2_ref[...] + beta2_ref[...]

    out_ref[...] = y.reshape(S, Bt, D).astype(out_ref.dtype)


def _pick_block_batch(batch, seq, target_rows=256, max_rows=2048):
    """Largest batch-tile that (a) divides B, (b) keeps the BlockSpec second-minor dim
    aligned (bt == B or bt % 8 == 0), (c) keeps Bt*S rows in a sane range."""
    cands = [bt for bt in range(1, batch + 1)
             if batch % bt == 0 and (bt == batch or bt % 8 == 0)]
    reaching = [bt for bt in cands if target_rows <= bt * seq <= max_rows]
    if reaching:
        return min(reaching)
    fitting = [bt for bt in cands if bt * seq <= max_rows]
    if fitting:
        return max(fitting)
    return min(cands)


def transformer_encoder_layer_forward(src, torch_params, *, nhead, eps=1e-5):
    """src: (S, B, D) PyTorch (seq, batch, embed) layout. Returns (S, B, D) float32.

    torch_params (PyTorch layouts):
      in_proj_weight (3D, D), in_proj_bias (3D,), out_proj_weight (D, D), out_proj_bias (D,),
      norm1_weight (D,), norm1_bias (D,), linear1_weight (F, D), linear1_bias (F,),
      linear2_weight (D, F), linear2_bias (D,), norm2_weight (D,), norm2_bias (D,)
    """
    (in_w, in_b, out_w, out_b, g1, be1, l1_w, l1_b, l2_w, l2_b, g2, be2) = torch_params
    S, B, D = src.shape
    assert D % nhead == 0, "d_model must be divisible by nhead"
    hd = D // nhead
    FF = l1_w.shape[0]

    # Kernel-layout params: (in, out) bf16 weights for the MXU, f32 biases / LN params,
    # 1/sqrt(head_dim) folded into the Q columns of the fused in-projection.
    qscale = jnp.concatenate([jnp.full((D,), 1.0 / math.sqrt(hd), jnp.float32),
                              jnp.ones((2 * D,), jnp.float32)])
    w_in = (in_w.astype(jnp.float32).T * qscale[None, :]).astype(jnp.bfloat16)   # (D, 3D)
    b_in = (in_b.astype(jnp.float32) * qscale).reshape(1, 3 * D)
    w_o = out_w.astype(jnp.float32).T.astype(jnp.bfloat16)                        # (D, D)
    b_o = out_b.astype(jnp.float32).reshape(1, D)
    w1 = l1_w.astype(jnp.float32).T.astype(jnp.bfloat16)                          # (D, F)
    bias1 = l1_b.astype(jnp.float32).reshape(1, FF)
    w2 = l2_w.astype(jnp.float32).T.astype(jnp.bfloat16)                          # (F, D)
    bias2 = l2_b.astype(jnp.float32).reshape(1, D)
    g1v = g1.astype(jnp.float32).reshape(1, D)
    be1v = be1.astype(jnp.float32).reshape(1, D)
    g2v = g2.astype(jnp.float32).reshape(1, D)
    be2v = be2.astype(jnp.float32).reshape(1, D)

    x = src.astype(jnp.float32)            # no HBM transpose: batch axis handled by BlockSpec

    Bt = _pick_block_batch(B, S)
    grid = (B // Bt,)

    vspec = functools.partial(pl.BlockSpec, memory_space=pltpu.MemorySpace.VMEM)

    def w_spec(arr):                        # whole weight, constant index_map -> VMEM-resident
        return vspec(arr.shape, lambda j: (0,) * arr.ndim)

    weights = (w_in, b_in, w_o, b_o, g1v, be1v, w1, bias1, w2, bias2, g2v, be2v)
    in_specs = [vspec((S, Bt, D), lambda j: (0, j, 0))] + [w_spec(a) for a in weights]
    out_specs = vspec((S, Bt, D), lambda j: (0, j, 0))

    # Explicit VMEM budget: (double-buffered) resident weights + in/out activation blocks
    # + headroom for compiler-internal scratch; clamped to fit every TPU generation.
    w_bytes = sum(int(a.size) * a.dtype.itemsize for a in weights)
    act_bytes = 4 * S * Bt * D
    vmem_limit = int(max(16 << 20, min(64 << 20, 2 * w_bytes + 4 * 2 * act_bytes + (8 << 20))))

    flops_per_b = (2 * S * D * 3 * D            # QKV projection
                   + 2 * 2 * S * S * D          # QK^T and P.V (summed over heads)
                   + 2 * S * D * D              # output projection
                   + 2 * 2 * S * D * FF)        # FFN
    cost = pl.CostEstimate(
        flops=int(B * flops_per_b),
        transcendentals=int(B * (nhead * S * S + nhead * S + 2 * S)),
        bytes_accessed=int(4 * 2 * B * S * D + w_bytes),
    )

    out = pl.pallas_call(
        functools.partial(_encoder_layer_kernel, nhead=nhead, eps=eps),
        out_shape=jax.ShapeDtypeStruct((S, B, D), jnp.float32),
        grid_spec=pltpu.PrefetchScalarGridSpec(
            num_scalar_prefetch=0,
            grid=grid,
            in_specs=in_specs,
            out_specs=out_specs),
        compiler_params=pltpu.CompilerParams(
            dimension_semantics=("parallel",),
            vmem_limit_bytes=vmem_limit),
        cost_estimate=cost,
    )(x, *weights)
    return out


def _reference_forward_np(src, torch_params, nhead, eps=1e-5):
    """Pure numpy (float64) reference of the eval-mode forward, PyTorch semantics."""
    (in_w, in_b, out_w, out_b, g1, b1, w1, bias1, w2, bias2, g2, b2) = [
        np.asarray(p, np.float64) for p in torch_params]
    x = np.asarray(src, np.float64)                           # (S, B, D)
    S, B, D = x.shape
    hd = D // nhead

    qkv = x @ in_w.T + in_b                                   # (S, B, 3D)
    q = qkv[..., :D] / math.sqrt(hd)
    k = qkv[..., D:2 * D]
    v = qkv[..., 2 * D:]

    def heads(t):                                             # (S, B, D) -> (B*H, S, hd)
        return t.reshape(S, B * nhead, hd).transpose(1, 0, 2)

    qh, kh, vh = heads(q), heads(k), heads(v)
    s = qh @ kh.transpose(0, 2, 1)                            # (B*H, S, S)
    s = s - s.max(-1, keepdims=True)
    p = np.exp(s)
    p = p / p.sum(-1, keepdims=True)
    ctx = (p @ vh).transpose(1, 0, 2).reshape(S, B, D)
    attn = ctx @ out_w.T + out_b

    def ln(t, g, b):
        mu = t.mean(-1, keepdims=True)
        var = ((t - mu) ** 2).mean(-1, keepdims=True)
        return (t - mu) / np.sqrt(var + eps) * g + b

    h1 = ln(x + attn, g1, b1)
    f = np.maximum(h1 @ w1.T + bias1, 0.0) @ w2.T + bias2
    return ln(h1 + f, g2, b2)


if __name__ == "__main__":
    # Small shapes consistent with the module: seq=8, batch=2, d_model=32,
    # nhead=4, dim_feedforward=64.
    S, B, D, NHEAD, FF = 8, 2, 32, 4, 64
    key = jax.random.PRNGKey(0)
    ks = jax.random.split(key, 8)

    def xavier(k, fan_out, fan_in):
        bound = math.sqrt(6.0 / (fan_in + fan_out))
        return jax.random.uniform(k, (fan_out, fan_in), jnp.float32, -bound, bound)

    def linear_init(kw, kb, fan_out, fan_in):
        bound = 1.0 / math.sqrt(fan_in)
        w = jax.random.uniform(kw, (fan_out, fan_in), jnp.float32, -bound, bound)
        b = jax.random.uniform(kb, (fan_out,), jnp.float32, -bound, bound)
        return w, b

    # PyTorch-layout parameters (out, in), mirroring the module's initializers.
    in_proj_w = xavier(ks[0], 3 * D, D)                   # xavier_uniform_
    in_proj_b = jnp.zeros((3 * D,), jnp.float32)          # constant_(0)
    out_proj_w, _ = linear_init(ks[1], ks[2], D, D)
    out_proj_b = jnp.zeros((D,), jnp.float32)             # constant_(0)
    lin1_w, lin1_b = linear_init(ks[3], ks[4], FF, D)
    lin2_w, lin2_b = linear_init(ks[5], ks[6], D, FF)
    g1 = jnp.ones((D,), jnp.float32); beta1 = jnp.zeros((D,), jnp.float32)
    g2 = jnp.ones((D,), jnp.float32); beta2 = jnp.zeros((D,), jnp.float32)

    torch_params = (in_proj_w, in_proj_b, out_proj_w, out_proj_b,
                    g1, beta1, lin1_w, lin1_b, lin2_w, lin2_b, g2, beta2)

    src = jax.random.normal(ks[7], (S, B, D), jnp.float32)

    out = transformer_encoder_layer_forward(src, torch_params, nhead=NHEAD)
    out = jax.block_until_ready(out)

    ref = _reference_forward_np(np.asarray(src), [np.asarray(p) for p in torch_params], NHEAD)
    # bf16 MXU operands with f32 accumulation -> a few-percent tolerance.
    np.testing.assert_allclose(np.asarray(out), ref, rtol=5e-2, atol=5e-2)
    assert out.shape == (S, B, D) and out.dtype == jnp.float32
    print("KERNEL_OK")
</pallas_src>

<mosaic_0001>
module attributes {stable_mosaic.version = 11 : i64} {
  func.func @_encoder_layer_kernel(%arg0: i32, %arg1: memref<8x2x32xf32, #tpu.memory_space<vmem>>, %arg2: memref<32x96xbf16, #tpu.memory_space<vmem>>, %arg3: memref<1x96xf32, #tpu.memory_space<vmem>>, %arg4: memref<32x32xbf16, #tpu.memory_space<vmem>>, %arg5: memref<1x32xf32, #tpu.memory_space<vmem>>, %arg6: memref<1x32xf32, #tpu.memory_space<vmem>>, %arg7: memref<1x32xf32, #tpu.memory_space<vmem>>, %arg8: memref<32x64xbf16, #tpu.memory_space<vmem>>, %arg9: memref<1x64xf32, #tpu.memory_space<vmem>>, %arg10: memref<64x32xbf16, #tpu.memory_space<vmem>>, %arg11: memref<1x32xf32, #tpu.memory_space<vmem>>, %arg12: memref<1x32xf32, #tpu.memory_space<vmem>>, %arg13: memref<1x32xf32, #tpu.memory_space<vmem>>, %arg14: memref<8x2x32xf32, #tpu.memory_space<vmem>>) attributes {dimension_semantics = [#tpu.dimension_semantics<parallel>], iteration_bounds = array<i64: 1>, scalar_prefetch = 0 : i64, scratch_operands = 0 : i64, tpu.core_type = #tpu.core_type<tc>, window_params = [{transform_indices = @transform_0, window_bounds = array<i64: 8, 2, 32>}, {pipeline_mode = #tpu.pipeline_mode<synchronous>, transform_indices = @transform_1, window_bounds = array<i64: 32, 96>}, {pipeline_mode = #tpu.pipeline_mode<synchronous>, transform_indices = @transform_2, window_bounds = array<i64: 1, 96>}, {pipeline_mode = #tpu.pipeline_mode<synchronous>, transform_indices = @transform_3, window_bounds = array<i64: 32, 32>}, {pipeline_mode = #tpu.pipeline_mode<synchronous>, transform_indices = @transform_4, window_bounds = array<i64: 1, 32>}, {pipeline_mode = #tpu.pipeline_mode<synchronous>, transform_indices = @transform_5, window_bounds = array<i64: 1, 32>}, {pipeline_mode = #tpu.pipeline_mode<synchronous>, transform_indices = @transform_6, window_bounds = array<i64: 1, 32>}, {pipeline_mode = #tpu.pipeline_mode<synchronous>, transform_indices = @transform_7, window_bounds = array<i64: 32, 64>}, {pipeline_mode = #tpu.pipeline_mode<synchronous>, transform_indices = @transform_8, window_bounds = array<i64: 1, 64>}, {pipeline_mode = #tpu.pipeline_mode<synchronous>, transform_indices = @transform_9, window_bounds = array<i64: 64, 32>}, {pipeline_mode = #tpu.pipeline_mode<synchronous>, transform_indices = @transform_10, window_bounds = array<i64: 1, 32>}, {pipeline_mode = #tpu.pipeline_mode<synchronous>, transform_indices = @transform_11, window_bounds = array<i64: 1, 32>}, {pipeline_mode = #tpu.pipeline_mode<synchronous>, transform_indices = @transform_12, window_bounds = array<i64: 1, 32>}, {transform_indices = @transform_13, window_bounds = array<i64: 8, 2, 32>}]} {
    %c0 = arith.constant 0 : index
    %c0_0 = arith.constant 0 : index
    %c0_1 = arith.constant 0 : index
    %0 = vector.load %arg1[%c0, %c0_0, %c0_1] : memref<8x2x32xf32, #tpu.memory_space<vmem>>, vector<8x2x32xf32>
    %1 = vector.shape_cast %0 : vector<8x2x32xf32> to vector<16x32xf32>
    %2 = arith.truncf %1 : vector<16x32xf32> to vector<16x32xbf16>
    %c0_2 = arith.constant 0 : index
    %c0_3 = arith.constant 0 : index
    %3 = vector.load %arg2[%c0_2, %c0_3] : memref<32x96xbf16, #tpu.memory_space<vmem>>, vector<32x96xbf16>
    %cst = arith.constant dense<0.000000e+00> : vector<16x96xf32>
    %4 = tpu.matmul %2, %3, %cst {dimension_numbers = #tpu.dot_dimension_numbers<[1], [0], [0], [1], [0, 0, 1, 1], [], []>} : vector<16x32xbf16>, vector<32x96xbf16>, vector<16x96xf32> -> vector<16x96xf32>
    %c0_4 = arith.constant 0 : index
    %c0_5 = arith.constant 0 : index
    %5 = vector.load %arg3[%c0_4, %c0_5] : memref<1x96xf32, #tpu.memory_space<vmem>>, vector<1x96xf32>
    %6 = vector.broadcast %5 : vector<1x96xf32> to vector<16x96xf32>
    %7 = arith.addf %4, %6 : vector<16x96xf32>
    %8 = vector.shape_cast %7 : vector<16x96xf32> to vector<8x2x96xf32>
    %c0_6 = arith.constant 0 : index
    %c0_7 = arith.constant 0 : index
    %9 = vector.load %arg4[%c0_6, %c0_7] : memref<32x32xbf16, #tpu.memory_space<vmem>>, vector<32x32xbf16>
    %cst_8 = arith.constant 0.000000e+00 : f32
    %10 = vector.broadcast %cst_8 : f32 to vector<8x32xf32>
    %11 = vector.extract_strided_slice %8 {offsets = [0, 0, 0], sizes = [8, 1, 8], strides = [1, 1, 1]} : vector<8x2x96xf32> to vector<8x1x8xf32>
    %12 = vector.shape_cast %11 : vector<8x1x8xf32> to vector<8x8xf32>
    %13 = arith.truncf %12 : vector<8x8xf32> to vector<8x8xbf16>
    %14 = vector.extract_strided_slice %8 {offsets = [0, 0, 32], sizes = [8, 1, 8], strides = [1, 1, 1]} : vector<8x2x96xf32> to vector<8x1x8xf32>
    %15 = vector.shape_cast %14 : vector<8x1x8xf32> to vector<8x8xf32>
    %16 = arith.truncf %15 : vector<8x8xf32> to vector<8x8xbf16>
    %17 = vector.extract_strided_slice %8 {offsets = [0, 0, 64], sizes = [8, 1, 8], strides = [1, 1, 1]} : vector<8x2x96xf32> to vector<8x1x8xf32>
    %18 = vector.shape_cast %17 : vector<8x1x8xf32> to vector<8x8xf32>
    %19 = arith.truncf %18 : vector<8x8xf32> to vector<8x8xbf16>
    %20 = tpu.transpose %16, [1, 0] : vector<8x8xbf16> -> vector<8x8xbf16>
    %cst_9 = arith.constant dense<0.000000e+00> : vector<8x8xf32>
    %21 = tpu.matmul %13, %20, %cst_9 {dimension_numbers = #tpu.dot_dimension_numbers<[1], [0], [0], [1], [0, 0, 1, 1], [], []>} : vector<8x8xbf16>, vector<8x8xbf16>, vector<8x8xf32> -> vector<8x8xf32>
    %cst_10 = arith.constant dense<0xFF800000> : vector<8xf32>
    %22 = vector.multi_reduction <maximumf>, %21, %cst_10 [1] : vector<8x8xf32> to vector<8xf32>
    %23 = vector.shape_cast %22 : vector<8xf32> to vector<8x1xf32>
    %24 = vector.broadcast %23 : vector<8x1xf32> to vector<8x8xf32>
    %25 = arith.subf %21, %24 : vector<8x8xf32>
    %26 = math.exp %25 : vector<8x8xf32>
    %cst_11 = arith.constant dense<0.000000e+00> : vector<8xf32>
    %27 = vector.multi_reduction <add>, %26, %cst_11 [1] : vector<8x8xf32> to vector<8xf32>
    %28 = vector.shape_cast %27 : vector<8xf32> to vector<8x1xf32>
    %29 = tpu.reciprocal %28 {approx = true} : vector<8x1xf32> -> vector<8x1xf32>
    %30 = vector.broadcast %29 : vector<8x1xf32> to vector<8x8xf32>
    %31 = arith.mulf %26, %30 : vector<8x8xf32>
    %32 = arith.truncf %31 : vector<8x8xf32> to vector<8x8xbf16>
    %cst_12 = arith.constant dense<0.000000e+00> : vector<8x8xf32>
    %33 = tpu.matmul %32, %19, %cst_12 {dimension_numbers = #tpu.dot_dimension_numbers<[1], [0], [0], [1], [0, 0, 1, 1], [], []>} : vector<8x8xbf16>, vector<8x8xbf16>, vector<8x8xf32> -> vector<8x8xf32>
    %34 = arith.truncf %33 : vector<8x8xf32> to vector<8x8xbf16>
    %35 = vector.extract_strided_slice %9 {offsets = [0, 0], sizes = [8, 32], strides = [1, 1]} : vector<32x32xbf16> to vector<8x32xbf16>
    %cst_13 = arith.constant dense<0.000000e+00> : vector<8x32xf32>
    %36 = tpu.matmul %34, %35, %cst_13 {dimension_numbers = #tpu.dot_dimension_numbers<[1], [0], [0], [1], [0, 0, 1, 1], [], []>} : vector<8x8xbf16>, vector<8x32xbf16>, vector<8x32xf32> -> vector<8x32xf32>
    %37 = arith.addf %10, %36 : vector<8x32xf32>
    %38 = vector.extract_strided_slice %8 {offsets = [0, 0, 8], sizes = [8, 1, 8], strides = [1, 1, 1]} : vector<8x2x96xf32> to vector<8x1x8xf32>
    %39 = vector.shape_cast %38 : vector<8x1x8xf32> to vector<8x8xf32>
    %40 = arith.truncf %39 : vector<8x8xf32> to vector<8x8xbf16>
    %41 = vector.extract_strided_slice %8 {offsets = [0, 0, 40], sizes = [8, 1, 8], strides = [1, 1, 1]} : vector<8x2x96xf32> to vector<8x1x8xf32>
    %42 = vector.shape_cast %41 : vector<8x1x8xf32> to vector<8x8xf32>
    %43 = arith.truncf %42 : vector<8x8xf32> to vector<8x8xbf16>
    %44 = vector.extract_strided_slice %8 {offsets = [0, 0, 72], sizes = [8, 1, 8], strides = [1, 1, 1]} : vector<8x2x96xf32> to vector<8x1x8xf32>
    %45 = vector.shape_cast %44 : vector<8x1x8xf32> to vector<8x8xf32>
    %46 = arith.truncf %45 : vector<8x8xf32> to vector<8x8xbf16>
    %47 = tpu.transpose %43, [1, 0] : vector<8x8xbf16> -> vector<8x8xbf16>
    %cst_14 = arith.constant dense<0.000000e+00> : vector<8x8xf32>
    %48 = tpu.matmul %40, %47, %cst_14 {dimension_numbers = #tpu.dot_dimension_numbers<[1], [0], [0], [1], [0, 0, 1, 1], [], []>} : vector<8x8xbf16>, vector<8x8xbf16>, vector<8x8xf32> -> vector<8x8xf32>
    %cst_15 = arith.constant dense<0xFF800000> : vector<8xf32>
    %49 = vector.multi_reduction <maximumf>, %48, %cst_15 [1] : vector<8x8xf32> to vector<8xf32>
    %50 = vector.shape_cast %49 : vector<8xf32> to vector<8x1xf32>
    %51 = vector.broadcast %50 : vector<8x1xf32> to vector<8x8xf32>
    %52 = arith.subf %48, %51 : vector<8x8xf32>
    %53 = math.exp %52 : vector<8x8xf32>
    %cst_16 = arith.constant dense<0.000000e+00> : vector<8xf32>
    %54 = vector.multi_reduction <add>, %53, %cst_16 [1] : vector<8x8xf32> to vector<8xf32>
    %55 = vector.shape_cast %54 : vector<8xf32> to vector<8x1xf32>
    %56 = tpu.reciprocal %55 {approx = true} : vector<8x1xf32> -> vector<8x1xf32>
    %57 = vector.broadcast %56 : vector<8x1xf32> to vector<8x8xf32>
    %58 = arith.mulf %53, %57 : vector<8x8xf32>
    %59 = arith.truncf %58 : vector<8x8xf32> to vector<8x8xbf16>
    %cst_17 = arith.constant dense<0.000000e+00> : vector<8x8xf32>
    %60 = tpu.matmul %59, %46, %cst_17 {dimension_numbers = #tpu.dot_dimension_numbers<[1], [0], [0], [1], [0, 0, 1, 1], [], []>} : vector<8x8xbf16>, vector<8x8xbf16>, vector<8x8xf32> -> vector<8x8xf32>
    %61 = arith.truncf %60 : vector<8x8xf32> to vector<8x8xbf16>
    %62 = vector.extract_strided_slice %9 {offsets = [8, 0], sizes = [8, 32], strides = [1, 1]} : vector<32x32xbf16> to vector<8x32xbf16>
    %cst_18 = arith.constant dense<0.000000e+00> : vector<8x32xf32>
    %63 = tpu.matmul %61, %62, %cst_18 {dimension_numbers = #tpu.dot_dimension_numbers<[1], [0], [0], [1], [0, 0, 1, 1], [], []>} : vector<8x8xbf16>, vector<8x32xbf16>, vector<8x32xf32> -> vector<8x32xf32>
    %64 = arith.addf %37, %63 : vector<8x32xf32>
    %65 = vector.extract_strided_slice %8 {offsets = [0, 0, 16], sizes = [8, 1, 8], strides = [1, 1, 1]} : vector<8x2x96xf32> to vector<8x1x8xf32>
    %66 = vector.shape_cast %65 : vector<8x1x8xf32> to vector<8x8xf32>
    %67 = arith.truncf %66 : vector<8x8xf32> to vector<8x8xbf16>
    %68 = vector.extract_strided_slice %8 {offsets = [0, 0, 48], sizes = [8, 1, 8], strides = [1, 1, 1]} : vector<8x2x96xf32> to vector<8x1x8xf32>
    %69 = vector.shape_cast %68 : vector<8x1x8xf32> to vector<8x8xf32>
    %70 = arith.truncf %69 : vector<8x8xf32> to vector<8x8xbf16>
    %71 = vector.extract_strided_slice %8 {offsets = [0, 0, 80], sizes = [8, 1, 8], strides = [1, 1, 1]} : vector<8x2x96xf32> to vector<8x1x8xf32>
    %72 = vector.shape_cast %71 : vector<8x1x8xf32> to vector<8x8xf32>
    %73 = arith.truncf %72 : vector<8x8xf32> to vector<8x8xbf16>
    %74 = tpu.transpose %70, [1, 0] : vector<8x8xbf16> -> vector<8x8xbf16>
    %cst_19 = arith.constant dense<0.000000e+00> : vector<8x8xf32>
    %75 = tpu.matmul %67, %74, %cst_19 {dimension_numbers = #tpu.dot_dimension_numbers<[1], [0], [0], [1], [0, 0, 1, 1], [], []>} : vector<8x8xbf16>, vector<8x8xbf16>, vector<8x8xf32> -> vector<8x8xf32>
    %cst_20 = arith.constant dense<0xFF800000> : vector<8xf32>
    %76 = vector.multi_reduction <maximumf>, %75, %cst_20 [1] : vector<8x8xf32> to vector<8xf32>
    %77 = vector.shape_cast %76 : vector<8xf32> to vector<8x1xf32>
    %78 = vector.broadcast %77 : vector<8x1xf32> to vector<8x8xf32>
    %79 = arith.subf %75, %78 : vector<8x8xf32>
    %80 = math.exp %79 : vector<8x8xf32>
    %cst_21 = arith.constant dense<0.000000e+00> : vector<8xf32>
    %81 = vector.multi_reduction <add>, %80, %cst_21 [1] : vector<8x8xf32> to vector<8xf32>
    %82 = vector.shape_cast %81 : vector<8xf32> to vector<8x1xf32>
    %83 = tpu.reciprocal %82 {approx = true} : vector<8x1xf32> -> vector<8x1xf32>
    %84 = vector.broadcast %83 : vector<8x1xf32> to vector<8x8xf32>
    %85 = arith.mulf %80, %84 : vector<8x8xf32>
    %86 = arith.truncf %85 : vector<8x8xf32> to vector<8x8xbf16>
    %cst_22 = arith.constant dense<0.000000e+00> : vector<8x8xf32>
    %87 = tpu.matmul %86, %73, %cst_22 {dimension_numbers = #tpu.dot_dimension_numbers<[1], [0], [0], [1], [0, 0, 1, 1], [], []>} : vector<8x8xbf16>, vector<8x8xbf16>, vector<8x8xf32> -> vector<8x8xf32>
    %88 = arith.truncf %87 : vector<8x8xf32> to vector<8x8xbf16>
    %89 = vector.extract_strided_slice %9 {offsets = [16, 0], sizes = [8, 32], strides = [1, 1]} : vector<32x32xbf16> to vector<8x32xbf16>
    %cst_23 = arith.constant dense<0.000000e+00> : vector<8x32xf32>
    %90 = tpu.matmul %88, %89, %cst_23 {dimension_numbers = #tpu.dot_dimension_numbers<[1], [0], [0], [1], [0, 0, 1, 1], [], []>} : vector<8x8xbf16>, vector<8x32xbf16>, vector<8x32xf32> -> vector<8x32xf32>
    %91 = arith.addf %64, %90 : vector<8x32xf32>
    %92 = vector.extract_strided_slice %8 {offsets = [0, 0, 24], sizes = [8, 1, 8], strides = [1, 1, 1]} : vector<8x2x96xf32> to vector<8x1x8xf32>
    %93 = vector.shape_cast %92 : vector<8x1x8xf32> to vector<8x8xf32>
    %94 = arith.truncf %93 : vector<8x8xf32> to vector<8x8xbf16>
    %95 = vector.extract_strided_slice %8 {offsets = [0, 0, 56], sizes = [8, 1, 8], strides = [1, 1, 1]} : vector<8x2x96xf32> to vector<8x1x8xf32>
    %96 = vector.shape_cast %95 : vector<8x1x8xf32> to vector<8x8xf32>
    %97 = arith.truncf %96 : vector<8x8xf32> to vector<8x8xbf16>
    %98 = vector.extract_strided_slice %8 {offsets = [0, 0, 88], sizes = [8, 1, 8], strides = [1, 1, 1]} : vector<8x2x96xf32> to vector<8x1x8xf32>
    %99 = vector.shape_cast %98 : vector<8x1x8xf32> to vector<8x8xf32>
    %100 = arith.truncf %99 : vector<8x8xf32> to vector<8x8xbf16>
    %101 = tpu.transpose %97, [1, 0] : vector<8x8xbf16> -> vector<8x8xbf16>
    %cst_24 = arith.constant dense<0.000000e+00> : vector<8x8xf32>
    %102 = tpu.matmul %94, %101, %cst_24 {dimension_numbers = #tpu.dot_dimension_numbers<[1], [0], [0], [1], [0, 0, 1, 1], [], []>} : vector<8x8xbf16>, vector<8x8xbf16>, vector<8x8xf32> -> vector<8x8xf32>
    %cst_25 = arith.constant dense<0xFF800000> : vector<8xf32>
    %103 = vector.multi_reduction <maximumf>, %102, %cst_25 [1] : vector<8x8xf32> to vector<8xf32>
    %104 = vector.shape_cast %103 : vector<8xf32> to vector<8x1xf32>
    %105 = vector.broadcast %104 : vector<8x1xf32> to vector<8x8xf32>
    %106 = arith.subf %102, %105 : vector<8x8xf32>
    %107 = math.exp %106 : vector<8x8xf32>
    %cst_26 = arith.constant dense<0.000000e+00> : vector<8xf32>
    %108 = vector.multi_reduction <add>, %107, %cst_26 [1] : vector<8x8xf32> to vector<8xf32>
    %109 = vector.shape_cast %108 : vector<8xf32> to vector<8x1xf32>
    %110 = tpu.reciprocal %109 {approx = true} : vector<8x1xf32> -> vector<8x1xf32>
    %111 = vector.broadcast %110 : vector<8x1xf32> to vector<8x8xf32>
    %112 = arith.mulf %107, %111 : vector<8x8xf32>
    %113 = arith.truncf %112 : vector<8x8xf32> to vector<8x8xbf16>
    %cst_27 = arith.constant dense<0.000000e+00> : vector<8x8xf32>
    %114 = tpu.matmul %113, %100, %cst_27 {dimension_numbers = #tpu.dot_dimension_numbers<[1], [0], [0], [1], [0, 0, 1, 1], [], []>} : vector<8x8xbf16>, vector<8x8xbf16>, vector<8x8xf32> -> vector<8x8xf32>
    %115 = arith.truncf %114 : vector<8x8xf32> to vector<8x8xbf16>
    %116 = vector.extract_strided_slice %9 {offsets = [24, 0], sizes = [8, 32], strides = [1, 1]} : vector<32x32xbf16> to vector<8x32xbf16>
    %cst_28 = arith.constant dense<0.000000e+00> : vector<8x32xf32>
    %117 = tpu.matmul %115, %116, %cst_28 {dimension_numbers = #tpu.dot_dimension_numbers<[1], [0], [0], [1], [0, 0, 1, 1], [], []>} : vector<8x8xbf16>, vector<8x32xbf16>, vector<8x32xf32> -> vector<8x32xf32>
    %118 = arith.addf %91, %117 : vector<8x32xf32>
    %119 = vector.shape_cast %118 : vector<8x32xf32> to vector<8x1x32xf32>
    %cst_29 = arith.constant 0.000000e+00 : f32
    %120 = vector.broadcast %cst_29 : f32 to vector<8x32xf32>
    %121 = vector.extract_strided_slice %8 {offsets = [0, 1, 0], sizes = [8, 1, 8], strides = [1, 1, 1]} : vector<8x2x96xf32> to vector<8x1x8xf32>
    %122 = vector.shape_cast %121 : vector<8x1x8xf32> to vector<8x8xf32>
    %123 = arith.truncf %122 : vector<8x8xf32> to vector<8x8xbf16>
    %124 = vector.extract_strided_slice %8 {offsets = [0, 1, 32], sizes = [8, 1, 8], strides = [1, 1, 1]} : vector<8x2x96xf32> to vector<8x1x8xf32>
    %125 = vector.shape_cast %124 : vector<8x1x8xf32> to vector<8x8xf32>
    %126 = arith.truncf %125 : vector<8x8xf32> to vector<8x8xbf16>
    %127 = vector.extract_strided_slice %8 {offsets = [0, 1, 64], sizes = [8, 1, 8], strides = [1, 1, 1]} : vector<8x2x96xf32> to vector<8x1x8xf32>
    %128 = vector.shape_cast %127 : vector<8x1x8xf32> to vector<8x8xf32>
    %129 = arith.truncf %128 : vector<8x8xf32> to vector<8x8xbf16>
    %130 = tpu.transpose %126, [1, 0] : vector<8x8xbf16> -> vector<8x8xbf16>
    %cst_30 = arith.constant dense<0.000000e+00> : vector<8x8xf32>
    %131 = tpu.matmul %123, %130, %cst_30 {dimension_numbers = #tpu.dot_dimension_numbers<[1], [0], [0], [1], [0, 0, 1, 1], [], []>} : vector<8x8xbf16>, vector<8x8xbf16>, vector<8x8xf32> -> vector<8x8xf32>
    %cst_31 = arith.constant dense<0xFF800000> : vector<8xf32>
    %132 = vector.multi_reduction <maximumf>, %131, %cst_31 [1] : vector<8x8xf32> to vector<8xf32>
    %133 = vector.shape_cast %132 : vector<8xf32> to vector<8x1xf32>
    %134 = vector.broadcast %133 : vector<8x1xf32> to vector<8x8xf32>
    %135 = arith.subf %131, %134 : vector<8x8xf32>
    %136 = math.exp %135 : vector<8x8xf32>
    %cst_32 = arith.constant dense<0.000000e+00> : vector<8xf32>
    %137 = vector.multi_reduction <add>, %136, %cst_32 [1] : vector<8x8xf32> to vector<8xf32>
    %138 = vector.shape_cast %137 : vector<8xf32> to vector<8x1xf32>
    %139 = tpu.reciprocal %138 {approx = true} : vector<8x1xf32> -> vector<8x1xf32>
    %140 = vector.broadcast %139 : vector<8x1xf32> to vector<8x8xf32>
    %141 = arith.mulf %136, %140 : vector<8x8xf32>
    %142 = arith.truncf %141 : vector<8x8xf32> to vector<8x8xbf16>
    %cst_33 = arith.constant dense<0.000000e+00> : vector<8x8xf32>
    %143 = tpu.matmul %142, %129, %cst_33 {dimension_numbers = #tpu.dot_dimension_numbers<[1], [0], [0], [1], [0, 0, 1, 1], [], []>} : vector<8x8xbf16>, vector<8x8xbf16>, vector<8x8xf32> -> vector<8x8xf32>
    %144 = arith.truncf %143 : vector<8x8xf32> to vector<8x8xbf16>
    %145 = vector.extract_strided_slice %9 {offsets = [0, 0], sizes = [8, 32], strides = [1, 1]} : vector<32x32xbf16> to vector<8x32xbf16>
    %cst_34 = arith.constant dense<0.000000e+00> : vector<8x32xf32>
    %146 = tpu.matmul %144, %145, %cst_34 {dimension_numbers = #tpu.dot_dimension_numbers<[1], [0], [0], [1], [0, 0, 1, 1], [], []>} : vector<8x8xbf16>, vector<8x32xbf16>, vector<8x32xf32> -> vector<8x32xf32>
    %147 = arith.addf %120, %146 : vector<8x32xf32>
    %148 = vector.extract_strided_slice %8 {offsets = [0, 1, 8], sizes = [8, 1, 8], strides = [1, 1, 1]} : vector<8x2x96xf32> to vector<8x1x8xf32>
    %149 = vector.shape_cast %148 : vector<8x1x8xf32> to vector<8x8xf32>
    %150 = arith.truncf %149 : vector<8x8xf32> to vector<8x8xbf16>
    %151 = vector.extract_strided_slice %8 {offsets = [0, 1, 40], sizes = [8, 1, 8], strides = [1, 1, 1]} : vector<8x2x96xf32> to vector<8x1x8xf32>
    %152 = vector.shape_cast %151 : vector<8x1x8xf32> to vector<8x8xf32>
    %153 = arith.truncf %152 : vector<8x8xf32> to vector<8x8xbf16>
    %154 = vector.extract_strided_slice %8 {offsets = [0, 1, 72], sizes = [8, 1, 8], strides = [1, 1, 1]} : vector<8x2x96xf32> to vector<8x1x8xf32>
    %155 = vector.shape_cast %154 : vector<8x1x8xf32> to vector<8x8xf32>
    %156 = arith.truncf %155 : vector<8x8xf32> to vector<8x8xbf16>
    %157 = tpu.transpose %153, [1, 0] : vector<8x8xbf16> -> vector<8x8xbf16>
    %cst_35 = arith.constant dense<0.000000e+00> : vector<8x8xf32>
    %158 = tpu.matmul %150, %157, %cst_35 {dimension_numbers = #tpu.dot_dimension_numbers<[1], [0], [0], [1], [0, 0, 1, 1], [], []>} : vector<8x8xbf16>, vector<8x8xbf16>, vector<8x8xf32> -> vector<8x8xf32>
    %cst_36 = arith.constant dense<0xFF800000> : vector<8xf32>
    %159 = vector.multi_reduction <maximumf>, %158, %cst_36 [1] : vector<8x8xf32> to vector<8xf32>
    %160 = vector.shape_cast %159 : vector<8xf32> to vector<8x1xf32>
    %161 = vector.broadcast %160 : vector<8x1xf32> to vector<8x8xf32>
    %162 = arith.subf %158, %161 : vector<8x8xf32>
    %163 = math.exp %162 : vector<8x8xf32>
    %cst_37 = arith.constant dense<0.000000e+00> : vector<8xf32>
    %164 = vector.multi_reduction <add>, %163, %cst_37 [1] : vector<8x8xf32> to vector<8xf32>
    %165 = vector.shape_cast %164 : vector<8xf32> to vector<8x1xf32>
    %166 = tpu.reciprocal %165 {approx = true} : vector<8x1xf32> -> vector<8x1xf32>
    %167 = vector.broadcast %166 : vector<8x1xf32> to vector<8x8xf32>
    %168 = arith.mulf %163, %167 : vector<8x8xf32>
    %169 = arith.truncf %168 : vector<8x8xf32> to vector<8x8xbf16>
    %cst_38 = arith.constant dense<0.000000e+00> : vector<8x8xf32>
    %170 = tpu.matmul %169, %156, %cst_38 {dimension_numbers = #tpu.dot_dimension_numbers<[1], [0], [0], [1], [0, 0, 1, 1], [], []>} : vector<8x8xbf16>, vector<8x8xbf16>, vector<8x8xf32> -> vector<8x8xf32>
    %171 = arith.truncf %170 : vector<8x8xf32> to vector<8x8xbf16>
    %172 = vector.extract_strided_slice %9 {offsets = [8, 0], sizes = [8, 32], strides = [1, 1]} : vector<32x32xbf16> to vector<8x32xbf16>
    %cst_39 = arith.constant dense<0.000000e+00> : vector<8x32xf32>
    %173 = tpu.matmul %171, %172, %cst_39 {dimension_numbers = #tpu.dot_dimension_numbers<[1], [0], [0], [1], [0, 0, 1, 1], [], []>} : vector<8x8xbf16>, vector<8x32xbf16>, vector<8x32xf32> -> vector<8x32xf32>
    %174 = arith.addf %147, %173 : vector<8x32xf32>
    %175 = vector.extract_strided_slice %8 {offsets = [0, 1, 16], sizes = [8, 1, 8], strides = [1, 1, 1]} : vector<8x2x96xf32> to vector<8x1x8xf32>
    %176 = vector.shape_cast %175 : vector<8x1x8xf32> to vector<8x8xf32>
    %177 = arith.truncf %176 : vector<8x8xf32> to vector<8x8xbf16>
    %178 = vector.extract_strided_slice %8 {offsets = [0, 1, 48], sizes = [8, 1, 8], strides = [1, 1, 1]} : vector<8x2x96xf32> to vector<8x1x8xf32>
    %179 = vector.shape_cast %178 : vector<8x1x8xf32> to vector<8x8xf32>
    %180 = arith.truncf %179 : vector<8x8xf32> to vector<8x8xbf16>
    %181 = vector.extract_strided_slice %8 {offsets = [0, 1, 80], sizes = [8, 1, 8], strides = [1, 1, 1]} : vector<8x2x96xf32> to vector<8x1x8xf32>
    %182 = vector.shape_cast %181 : vector<8x1x8xf32> to vector<8x8xf32>
    %183 = arith.truncf %182 : vector<8x8xf32> to vector<8x8xbf16>
    %184 = tpu.transpose %180, [1, 0] : vector<8x8xbf16> -> vector<8x8xbf16>
    %cst_40 = arith.constant dense<0.000000e+00> : vector<8x8xf32>
    %185 = tpu.matmul %177, %184, %cst_40 {dimension_numbers = #tpu.dot_dimension_numbers<[1], [0], [0], [1], [0, 0, 1, 1], [], []>} : vector<8x8xbf16>, vector<8x8xbf16>, vector<8x8xf32> -> vector<8x8xf32>
    %cst_41 = arith.constant dense<0xFF800000> : vector<8xf32>
    %186 = vector.multi_reduction <maximumf>, %185, %cst_41 [1] : vector<8x8xf32> to vector<8xf32>
    %187 = vector.shape_cast %186 : vector<8xf32> to vector<8x1xf32>
    %188 = vector.broadcast %187 : vector<8x1xf32> to vector<8x8xf32>
    %189 = arith.subf %185, %188 : vector<8x8xf32>
    %190 = math.exp %189 : vector<8x8xf32>
    %cst_42 = arith.constant dense<0.000000e+00> : vector<8xf32>
    %191 = vector.multi_reduction <add>, %190, %cst_42 [1] : vector<8x8xf32> to vector<8xf32>
    %192 = vector.shape_cast %191 : vector<8xf32> to vector<8x1xf32>
    %193 = tpu.reciprocal %192 {approx = true} : vector<8x1xf32> -> vector<8x1xf32>
    %194 = vector.broadcast %193 : vector<8x1xf32> to vector<8x8xf32>
    %195 = arith.mulf %190, %194 : vector<8x8xf32>
    %196 = arith.truncf %195 : vector<8x8xf32> to vector<8x8xbf16>
    %cst_43 = arith.constant dense<0.000000e+00> : vector<8x8xf32>
    %197 = tpu.matmul %196, %183, %cst_43 {dimension_numbers = #tpu.dot_dimension_numbers<[1], [0], [0], [1], [0, 0, 1, 1], [], []>} : vector<8x8xbf16>, vector<8x8xbf16>, vector<8x8xf32> -> vector<8x8xf32>
    %198 = arith.truncf %197 : vector<8x8xf32> to vector<8x8xbf16>
    %199 = vector.extract_strided_slice %9 {offsets = [16, 0], sizes = [8, 32], strides = [1, 1]} : vector<32x32xbf16> to vector<8x32xbf16>
    %cst_44 = arith.constant dense<0.000000e+00> : vector<8x32xf32>
    %200 = tpu.matmul %198, %199, %cst_44 {dimension_numbers = #tpu.dot_dimension_numbers<[1], [0], [0], [1], [0, 0, 1, 1], [], []>} : vector<8x8xbf16>, vector<8x32xbf16>, vector<8x32xf32> -> vector<8x32xf32>
    %201 = arith.addf %174, %200 : vector<8x32xf32>
    %202 = vector.extract_strided_slice %8 {offsets = [0, 1, 24], sizes = [8, 1, 8], strides = [1, 1, 1]} : vector<8x2x96xf32> to vector<8x1x8xf32>
    %203 = vector.shape_cast %202 : vector<8x1x8xf32> to vector<8x8xf32>
    %204 = arith.truncf %203 : vector<8x8xf32> to vector<8x8xbf16>
    %205 = vector.extract_strided_slice %8 {offsets = [0, 1, 56], sizes = [8, 1, 8], strides = [1, 1, 1]} : vector<8x2x96xf32> to vector<8x1x8xf32>
    %206 = vector.shape_cast %205 : vector<8x1x8xf32> to vector<8x8xf32>
    %207 = arith.truncf %206 : vector<8x8xf32> to vector<8x8xbf16>
    %208 = vector.extract_strided_slice %8 {offsets = [0, 1, 88], sizes = [8, 1, 8], strides = [1, 1, 1]} : vector<8x2x96xf32> to vector<8x1x8xf32>
    %209 = vector.shape_cast %208 : vector<8x1x8xf32> to vector<8x8xf32>
    %210 = arith.truncf %209 : vector<8x8xf32> to vector<8x8xbf16>
    %211 = tpu.transpose %207, [1, 0] : vector<8x8xbf16> -> vector<8x8xbf16>
    %cst_45 = arith.constant dense<0.000000e+00> : vector<8x8xf32>
    %212 = tpu.matmul %204, %211, %cst_45 {dimension_numbers = #tpu.dot_dimension_numbers<[1], [0], [0], [1], [0, 0, 1, 1], [], []>} : vector<8x8xbf16>, vector<8x8xbf16>, vector<8x8xf32> -> vector<8x8xf32>
    %cst_46 = arith.constant dense<0xFF800000> : vector<8xf32>
    %213 = vector.multi_reduction <maximumf>, %212, %cst_46 [1] : vector<8x8xf32> to vector<8xf32>
    %214 = vector.shape_cast %213 : vector<8xf32> to vector<8x1xf32>
    %215 = vector.broadcast %214 : vector<8x1xf32> to vector<8x8xf32>
    %216 = arith.subf %212, %215 : vector<8x8xf32>
    %217 = math.exp %216 : vector<8x8xf32>
    %cst_47 = arith.constant dense<0.000000e+00> : vector<8xf32>
    %218 = vector.multi_reduction <add>, %217, %cst_47 [1] : vector<8x8xf32> to vector<8xf32>
    %219 = vector.shape_cast %218 : vector<8xf32> to vector<8x1xf32>
    %220 = tpu.reciprocal %219 {approx = true} : vector<8x1xf32> -> vector<8x1xf32>
    %221 = vector.broadcast %220 : vector<8x1xf32> to vector<8x8xf32>
    %222 = arith.mulf %217, %221 : vector<8x8xf32>
    %223 = arith.truncf %222 : vector<8x8xf32> to vector<8x8xbf16>
    %cst_48 = arith.constant dense<0.000000e+00> : vector<8x8xf32>
    %224 = tpu.matmul %223, %210, %cst_48 {dimension_numbers = #tpu.dot_dimension_numbers<[1], [0], [0], [1], [0, 0, 1, 1], [], []>} : vector<8x8xbf16>, vector<8x8xbf16>, vector<8x8xf32> -> vector<8x8xf32>
    %225 = arith.truncf %224 : vector<8x8xf32> to vector<8x8xbf16>
    %226 = vector.extract_strided_slice %9 {offsets = [24, 0], sizes = [8, 32], strides = [1, 1]} : vector<32x32xbf16> to vector<8x32xbf16>
    %cst_49 = arith.constant dense<0.000000e+00> : vector<8x32xf32>
    %227 = tpu.matmul %225, %226, %cst_49 {dimension_numbers = #tpu.dot_dimension_numbers<[1], [0], [0], [1], [0, 0, 1, 1], [], []>} : vector<8x8xbf16>, vector<8x32xbf16>, vector<8x32xf32> -> vector<8x32xf32>
    %228 = arith.addf %201, %227 : vector<8x32xf32>
    %229 = vector.shape_cast %228 : vector<8x32xf32> to vector<8x1x32xf32>
    %230 = tpu.concatenate %119, %229 in 1 : vector<8x1x32xf32>, vector<8x1x32xf32> -> vector<8x2x32xf32>
    %231 = vector.shape_cast %230 : vector<8x2x32xf32> to vector<16x32xf32>
    %c0_50 = arith.constant 0 : index
    %c0_51 = arith.constant 0 : index
    %232 = vector.load %arg5[%c0_50, %c0_51] : memref<1x32xf32, #tpu.memory_space<vmem>>, vector<1x32xf32>
    %233 = vector.broadcast %232 : vector<1x32xf32> to vector<16x32xf32>
    %234 = arith.addf %231, %233 : vector<16x32xf32>
    %235 = arith.addf %1, %234 : vector<16x32xf32>
    %cst_52 = arith.constant dense<0.000000e+00> : vector<16xf32>
    %236 = vector.multi_reduction <add>, %235, %cst_52 [1] : vector<16x32xf32> to vector<16xf32>
    %237 = vector.shape_cast %236 : vector<16xf32> to vector<16x1xf32>
    %cst_53 = arith.constant 3.200000e+01 : f32
    %238 = vector.broadcast %cst_53 : f32 to vector<16x1xf32>
    %239 = arith.divf %237, %238 : vector<16x1xf32>
    %240 = vector.broadcast %239 : vector<16x1xf32> to vector<16x32xf32>
    %241 = arith.subf %235, %240 : vector<16x32xf32>
    %242 = vector.broadcast %239 : vector<16x1xf32> to vector<16x32xf32>
    %243 = arith.subf %235, %242 : vector<16x32xf32>
    %244 = arith.mulf %241, %243 : vector<16x32xf32>
    %cst_54 = arith.constant dense<0.000000e+00> : vector<16xf32>
    %245 = vector.multi_reduction <add>, %244, %cst_54 [1] : vector<16x32xf32> to vector<16xf32>
    %246 = vector.shape_cast %245 : vector<16xf32> to vector<16x1xf32>
    %cst_55 = arith.constant 3.200000e+01 : f32
    %247 = vector.broadcast %cst_55 : f32 to vector<16x1xf32>
    %248 = arith.divf %246, %247 : vector<16x1xf32>
    %249 = vector.broadcast %239 : vector<16x1xf32> to vector<16x32xf32>
    %250 = arith.subf %235, %249 : vector<16x32xf32>
    %cst_56 = arith.constant 9.99999974E-6 : f32
    %251 = vector.broadcast %cst_56 : f32 to vector<16x1xf32>
    %252 = arith.addf %248, %251 : vector<16x1xf32>
    %253 = math.rsqrt %252 : vector<16x1xf32>
    %254 = vector.broadcast %253 : vector<16x1xf32> to vector<16x32xf32>
    %255 = arith.mulf %250, %254 : vector<16x32xf32>
    %c0_57 = arith.constant 0 : index
    %c0_58 = arith.constant 0 : index
    %256 = vector.load %arg6[%c0_57, %c0_58] : memref<1x32xf32, #tpu.memory_space<vmem>>, vector<1x32xf32>
    %257 = vector.broadcast %256 : vector<1x32xf32> to vector<16x32xf32>
    %258 = arith.mulf %255, %257 : vector<16x32xf32>
    %c0_59 = arith.constant 0 : index
    %c0_60 = arith.constant 0 : index
    %259 = vector.load %arg7[%c0_59, %c0_60] : memref<1x32xf32, #tpu.memory_space<vmem>>, vector<1x32xf32>
    %260 = vector.broadcast %259 : vector<1x32xf32> to vector<16x32xf32>
    %261 = arith.addf %258, %260 : vector<16x32xf32>
    %262 = arith.truncf %261 : vector<16x32xf32> to vector<16x32xbf16>
    %c0_61 = arith.constant 0 : index
    %c0_62 = arith.constant 0 : index
    %263 = vector.load %arg8[%c0_61, %c0_62] : memref<32x64xbf16, #tpu.memory_space<vmem>>, vector<32x64xbf16>
    %cst_63 = arith.constant dense<0.000000e+00> : vector<16x64xf32>
    %264 = tpu.matmul %262, %263, %cst_63 {dimension_numbers = #tpu.dot_dimension_numbers<[1], [0], [0], [1], [0, 0, 1, 1], [], []>} : vector<16x32xbf16>, vector<32x64xbf16>, vector<16x64xf32> -> vector<16x64xf32>
    %c0_64 = arith.constant 0 : index
    %c0_65 = arith.constant 0 : index
    %265 = vector.load %arg9[%c0_64, %c0_65] : memref<1x64xf32, #tpu.memory_space<vmem>>, vector<1x64xf32>
    %266 = vector.broadcast %265 : vector<1x64xf32> to vector<16x64xf32>
    %267 = arith.addf %264, %266 : vector<16x64xf32>
    %cst_66 = arith.constant 0.000000e+00 : f32
    %268 = vector.broadcast %cst_66 : f32 to vector<16x64xf32>
    %269 = arith.maximumf %267, %268 : vector<16x64xf32>
    %270 = arith.truncf %269 : vector<16x64xf32> to vector<16x64xbf16>
    %c0_67 = arith.constant 0 : index
    %c0_68 = arith.constant 0 : index
    %271 = vector.load %arg10[%c0_67, %c0_68] : memref<64x32xbf16, #tpu.memory_space<vmem>>, vector<64x32xbf16>
    %cst_69 = arith.constant dense<0.000000e+00> : vector<16x32xf32>
    %272 = tpu.matmul %270, %271, %cst_69 {dimension_numbers = #tpu.dot_dimension_numbers<[1], [0], [0], [1], [0, 0, 1, 1], [], []>} : vector<16x64xbf16>, vector<64x32xbf16>, vector<16x32xf32> -> vector<16x32xf32>
    %c0_70 = arith.constant 0 : index
    %c0_71 = arith.constant 0 : index
    %273 = vector.load %arg11[%c0_70, %c0_71] : memref<1x32xf32, #tpu.memory_space<vmem>>, vector<1x32xf32>
    %274 = vector.broadcast %273 : vector<1x32xf32> to vector<16x32xf32>
    %275 = arith.addf %272, %274 : vector<16x32xf32>
    %276 = arith.addf %261, %275 : vector<16x32xf32>
    %cst_72 = arith.constant dense<0.000000e+00> : vector<16xf32>
    %277 = vector.multi_reduction <add>, %276, %cst_72 [1] : vector<16x32xf32> to vector<16xf32>
    %278 = vector.shape_cast %277 : vector<16xf32> to vector<16x1xf32>
    %cst_73 = arith.constant 3.200000e+01 : f32
    %279 = vector.broadcast %cst_73 : f32 to vector<16x1xf32>
    %280 = arith.divf %278, %279 : vector<16x1xf32>
    %281 = vector.broadcast %280 : vector<16x1xf32> to vector<16x32xf32>
    %282 = arith.subf %276, %281 : vector<16x32xf32>
    %283 = vector.broadcast %280 : vector<16x1xf32> to vector<16x32xf32>
    %284 = arith.subf %276, %283 : vector<16x32xf32>
    %285 = arith.mulf %282, %284 : vector<16x32xf32>
    %cst_74 = arith.constant dense<0.000000e+00> : vector<16xf32>
    %286 = vector.multi_reduction <add>, %285, %cst_74 [1] : vector<16x32xf32> to vector<16xf32>
    %287 = vector.shape_cast %286 : vector<16xf32> to vector<16x1xf32>
    %cst_75 = arith.constant 3.200000e+01 : f32
    %288 = vector.broadcast %cst_75 : f32 to vector<16x1xf32>
    %289 = arith.divf %287, %288 : vector<16x1xf32>
    %290 = vector.broadcast %280 : vector<16x1xf32> to vector<16x32xf32>
    %291 = arith.subf %276, %290 : vector<16x32xf32>
    %cst_76 = arith.constant 9.99999974E-6 : f32
    %292 = vector.broadcast %cst_76 : f32 to vector<16x1xf32>
    %293 = arith.addf %289, %292 : vector<16x1xf32>
    %294 = math.rsqrt %293 : vector<16x1xf32>
    %295 = vector.broadcast %294 : vector<16x1xf32> to vector<16x32xf32>
    %296 = arith.mulf %291, %295 : vector<16x32xf32>
    %c0_77 = arith.constant 0 : index
    %c0_78 = arith.constant 0 : index
    %297 = vector.load %arg12[%c0_77, %c0_78] : memref<1x32xf32, #tpu.memory_space<vmem>>, vector<1x32xf32>
    %298 = vector.broadcast %297 : vector<1x32xf32> to vector<16x32xf32>
    %299 = arith.mulf %296, %298 : vector<16x32xf32>
    %c0_79 = arith.constant 0 : index
    %c0_80 = arith.constant 0 : index
    %300 = vector.load %arg13[%c0_79, %c0_80] : memref<1x32xf32, #tpu.memory_space<vmem>>, vector<1x32xf32>
    %301 = vector.broadcast %300 : vector<1x32xf32> to vector<16x32xf32>
    %302 = arith.addf %299, %301 : vector<16x32xf32>
    %303 = vector.shape_cast %302 : vector<16x32xf32> to vector<8x2x32xf32>
    %c0_81 = arith.constant 0 : index
    %c0_82 = arith.constant 0 : index
    %c0_83 = arith.constant 0 : index
    %304 = vector.load %arg14[%c0_81, %c0_82, %c0_83] : memref<8x2x32xf32, #tpu.memory_space<vmem>>, vector<8x2x32xf32>
    tpu.vector_store %arg14[%c0_81, %c0_82, %c0_83], %303 {strides = array<i32>} : memref<8x2x32xf32, #tpu.memory_space<vmem>>, vector<8x2x32xf32>,
    return
  }
  func.func @transform_0(%arg0: i32) -> (i32, i32, i32) {
    %c0_i32 = arith.constant 0 : i32
    %c0_i32_0 = arith.constant 0 : i32
    %c0_i32_1 = arith.constant 0 : i32
    return %c0_i32, %arg0, %c0_i32_0 : i32, i32, i32
  }
  func.func @transform_1(%arg0: i32) -> (i32, i32) {
    %c0_i32 = arith.constant 0 : i32
    %c0_i32_0 = arith.constant 0 : i32
    %c0_i32_1 = arith.constant 0 : i32
    return %c0_i32, %c0_i32_0 : i32, i32
  }
  func.func @transform_2(%arg0: i32) -> (i32, i32) {
    %c0_i32 = arith.constant 0 : i32
    %c0_i32_0 = arith.constant 0 : i32
    %c0_i32_1 = arith.constant 0 : i32
    return %c0_i32, %c0_i32_0 : i32, i32
  }
  func.func @transform_3(%arg0: i32) -> (i32, i32) {
    %c0_i32 = arith.constant 0 : i32
    %c0_i32_0 = arith.constant 0 : i32
    %c0_i32_1 = arith.constant 0 : i32
    return %c0_i32, %c0_i32_0 : i32, i32
  }
  func.func @transform_4(%arg0: i32) -> (i32, i32) {
    %c0_i32 = arith.constant 0 : i32
    %c0_i32_0 = arith.constant 0 : i32
    %c0_i32_1 = arith.constant 0 : i32
    return %c0_i32, %c0_i32_0 : i32, i32
  }
  func.func @transform_5(%arg0: i32) -> (i32, i32) {
    %c0_i32 = arith.constant 0 : i32
    %c0_i32_0 = arith.constant 0 : i32
    %c0_i32_1 = arith.constant 0 : i32
    return %c0_i32, %c0_i32_0 : i32, i32
  }
  func.func @transform_6(%arg0: i32) -> (i32, i32) {
    %c0_i32 = arith.constant 0 : i32
    %c0_i32_0 = arith.constant 0 : i32
    %c0_i32_1 = arith.constant 0 : i32
    return %c0_i32, %c0_i32_0 : i32, i32
  }
  func.func @transform_7(%arg0: i32) -> (i32, i32) {
    %c0_i32 = arith.constant 0 : i32
    %c0_i32_0 = arith.constant 0 : i32
    %c0_i32_1 = arith.constant 0 : i32
    return %c0_i32, %c0_i32_0 : i32, i32
  }
  func.func @transform_8(%arg0: i32) -> (i32, i32) {
    %c0_i32 = arith.constant 0 : i32
    %c0_i32_0 = arith.constant 0 : i32
    %c0_i32_1 = arith.constant 0 : i32
    return %c0_i32, %c0_i32_0 : i32, i32
  }
  func.func @transform_9(%arg0: i32) -> (i32, i32) {
    %c0_i32 = arith.constant 0 : i32
    %c0_i32_0 = arith.constant 0 : i32
    %c0_i32_1 = arith.constant 0 : i32
    return %c0_i32, %c0_i32_0 : i32, i32
  }
  func.func @transform_10(%arg0: i32) -> (i32, i32) {
    %c0_i32 = arith.constant 0 : i32
    %c0_i32_0 = arith.constant 0 : i32
    %c0_i32_1 = arith.constant 0 : i32
    return %c0_i32, %c0_i32_0 : i32, i32
  }
  func.func @transform_11(%arg0: i32) -> (i32, i32) {
    %c0_i32 = arith.constant 0 : i32
    %c0_i32_0 = arith.constant 0 : i32
    %c0_i32_1 = arith.constant 0 : i32
    return %c0_i32, %c0_i32_0 : i32, i32
  }
  func.func @transform_12(%arg0: i32) -> (i32, i32) {
    %c0_i32 = arith.constant 0 : i32
    %c0_i32_0 = arith.constant 0 : i32
    %c0_i32_1 = arith.constant 0 : i32
    return %c0_i32, %c0_i32_0 : i32, i32
  }
  func.func @transform_13(%arg0: i32) -> (i32, i32, i32) {
    %c0_i32 = arith.constant 0 : i32
    %c0_i32_0 = arith.constant 0 : i32
    %c0_i32_1 = arith.constant 0 : i32
    return %c0_i32, %arg0, %c0_i32_0 : i32, i32, i32
  }
}

</mosaic_0001>

<llo_original>
// kernel: tpu_custom_call.1
$region0: #{tpu_custom_call.1}
  #allocation0 [shape = 'u32[]', space=smem, size = 0x4, offset = 0x4, fixed_abs, tag = 'smem constant byte address 0x4 - core index']
  #allocation1 [shape = 'u32[72,128]{1,0:T(1,128)}', space=vmem, size = 0x9000, scoped, tag = 'internal scratch']
  %s0 = inlined_call_operand.vmem [shape: f32[8,2,32], index: 0, kind: input, shape index: {}]
  %s1 = inlined_call_operand.vmem [shape: bf16[32,96], index: 1, kind: input, shape index: {}]
  %s2 = inlined_call_operand.vmem [shape: f32[1,96], index: 2, kind: input, shape index: {}]
  %s3 = inlined_call_operand.vmem [shape: bf16[32,32], index: 3, kind: input, shape index: {}]
  %s4 = inlined_call_operand.vmem [shape: f32[1,32], index: 4, kind: input, shape index: {}]
  %s5 = inlined_call_operand.vmem [shape: f32[1,32], index: 5, kind: input, shape index: {}]
  %s6 = inlined_call_operand.vmem [shape: f32[1,32], index: 6, kind: input, shape index: {}]
  %s7 = inlined_call_operand.hbm [shape: bf16[32,64], index: 7, kind: input, shape index: {}]
  %s8 = inlined_call_operand.vmem [shape: f32[1,64], index: 8, kind: input, shape index: {}]
  %s9 = inlined_call_operand.vmem [shape: bf16[64,32], index: 9, kind: input, shape index: {}]
  %s10 = inlined_call_operand.vmem [shape: f32[1,32], index: 10, kind: input, shape index: {}]
  %s11 = inlined_call_operand.vmem [shape: f32[1,32], index: 11, kind: input, shape index: {}]
  %s12 = inlined_call_operand.vmem [shape: f32[1,32], index: 12, kind: input, shape index: {}]
  %s13 = inlined_call_operand.hbm [shape: f32[8,2,32], index: 13, kind: output, shape index: {}]
  %s14 = sld [smem:[#allocation0]]
  $region66: #{tpu_custom_call.1} parent=0
    _
  %s16 = ssub.s32 1, %s14
  %s17 = scalar_select 0, %s16, %s14
  $region1: #{tpu_custom_call.1} parent=0
    #allocation2 [shape = 'u8[8192]{0}', space=vmem, size = 0x2000, scoped, tag = 'input window, operand 7, single buffered']
    #allocation3 [shape = 's32[1]{0}', space=sflag, size = 0x4, scoped, tag = 'scoped memory for tpu_custom_call.1']
    #allocation4 [shape = 's32[1]{0}', space=sflag, size = 0x4, scoped, tag = 'scoped memory for tpu_custom_call.1']
    #allocation5 [shape = 'u8[8192]{0}', space=vmem, size = 0x2000, scoped, tag = 'output window, operand 0, single buffered']
    %18 = vsyncpa [#allocation3], 0
    %19 = vsyncpa [#allocation4], 0
    // Predicated region
    $region2: #{tpu_custom_call.1} parent=1 // pred_check
      _
    $region3: #{tpu_custom_call.1} parent=1 // pred_check_branch
      %21 = sbr.rel (0) target = $region5
    $region4: #{tpu_custom_call.1} parent=1 // pred_region
      _
    $region5: #{tpu_custom_call.1} parent=1 // pred_fallthru
      _
    // Predicated region
    $region6: #{tpu_custom_call.1} parent=1 // pred_check
      _
    $region7: #{tpu_custom_call.1} parent=1 // pred_check_branch
      %23 = sbr.rel (0) target = $region9
    $region8: #{tpu_custom_call.1} parent=1 // pred_region
      _
    $region9: #{tpu_custom_call.1} parent=1 // pred_fallthru
      _
    // Predicated region
    $region10: #{tpu_custom_call.1} parent=1 // pred_check
      _
    $region11: #{tpu_custom_call.1} parent=1 // pred_check_branch
      %25 = sbr.rel (0) target = $region13
    $region12: #{tpu_custom_call.1} parent=1 // pred_region
      _
    $region13: #{tpu_custom_call.1} parent=1 // pred_fallthru
      _
    // Predicated region
    $region14: #{tpu_custom_call.1} parent=1 // pred_check
      _
    $region15: #{tpu_custom_call.1} parent=1 // pred_check_branch
      %27 = sbr.rel (0) target = $region17
    $region16: #{tpu_custom_call.1} parent=1 // pred_region
      _
    $region17: #{tpu_custom_call.1} parent=1 // pred_fallthru
      _
    // Predicated region
    $region18: #{tpu_custom_call.1} parent=1 // pred_check
      _
    $region19: #{tpu_custom_call.1} parent=1 // pred_check_branch
      %29 = sbr.rel (0) target = $region21
    $region20: #{tpu_custom_call.1} parent=1 // pred_region
      _
    $region21: #{tpu_custom_call.1} parent=1 // pred_fallthru
      _
    // Predicated region
    $region22: #{tpu_custom_call.1} parent=1 // pred_check
      _
    $region23: #{tpu_custom_call.1} parent=1 // pred_check_branch
      %31 = sbr.rel (0) target = $region25
    $region24: #{tpu_custom_call.1} parent=1 // pred_region
      _
    $region25: #{tpu_custom_call.1} parent=1 // pred_fallthru
      _
    // Predicated region
    $region26: #{tpu_custom_call.1} parent=1 // pred_check
      _
    $region27: #{tpu_custom_call.1} parent=1 // pred_check_branch
      %33 = sbr.rel (0) target = $region29
    $region28: #{tpu_custom_call.1} parent=1 // pred_region
      _
    $region29: #{tpu_custom_call.1} parent=1 // pred_fallthru
      _
    // Predicated region
    $region30: #{tpu_custom_call.1} parent=1 // pred_check
      _
    $region31: #{tpu_custom_call.1} parent=1 // pred_check_branch
      %35 = sbr.rel (0) target = $region33
    $region32: #{tpu_custom_call.1} parent=1 // pred_region
      %37 = vsyncadd [#allocation3], 0
      %s38 = sshll.u32 %s7, 4
      %s39 = int_to_ptr.hbm [resolvable:$true] %s38
      %s40 = sshll.u32 [#allocation2], 4
      %s41 = int_to_ptr.vmem [resolvable:$true] %s40
      %46 = dma.hbm_to_vmem [thread:$0]  %s39, 256, %s41, [#allocation3], 64, 64, 4
    $region33: #{tpu_custom_call.1} parent=1 // pred_fallthru
      _
    // Predicated region
    $region34: #{tpu_custom_call.1} parent=1 // pred_check
      _
    $region35: #{tpu_custom_call.1} parent=1 // pred_check_branch
      %48 = sbr.rel (0) target = $region37
    $region36: #{tpu_custom_call.1} parent=1 // pred_region
      _
    $region37: #{tpu_custom_call.1} parent=1 // pred_fallthru
      _
    // Predicated region
    $region38: #{tpu_custom_call.1} parent=1 // pred_check
      _
    $region39: #{tpu_custom_call.1} parent=1 // pred_check_branch
      %50 = sbr.rel (0) target = $region41
    $region40: #{tpu_custom_call.1} parent=1 // pred_region
      _
    $region41: #{tpu_custom_call.1} parent=1 // pred_fallthru
      _
    // Predicated region
    $region42: #{tpu_custom_call.1} parent=1 // pred_check
      _
    $region43: #{tpu_custom_call.1} parent=1 // pred_check_branch
      %52 = sbr.rel (0) target = $region45
    $region44: #{tpu_custom_call.1} parent=1 // pred_region
      _
    $region45: #{tpu_custom_call.1} parent=1 // pred_fallthru
      _
    // Predicated region
    $region46: #{tpu_custom_call.1} parent=1 // pred_check
      _
    $region47: #{tpu_custom_call.1} parent=1 // pred_check_branch
      %54 = sbr.rel (0) target = $region49
    $region48: #{tpu_custom_call.1} parent=1 // pred_region
      _
    $region49: #{tpu_custom_call.1} parent=1 // pred_fallthru
      _
    // Predicated region
    $region50: #{tpu_custom_call.1} parent=1 // pred_check
      _
    $region51: #{tpu_custom_call.1} parent=1 // pred_check_branch
      %56 = sbr.rel (0) target = $region53
    $region52: #{tpu_custom_call.1} parent=1 // pred_region
      _
    $region53: #{tpu_custom_call.1} parent=1 // pred_fallthru
      _
    // Predicated region
    $region54: #{tpu_custom_call.1} parent=1 // pred_check
      _
    $region55: #{tpu_custom_call.1} parent=1 // pred_check_branch
      %58 = sbr.rel (0) target = $region57
    $region56: #{tpu_custom_call.1} parent=1 // pred_region
      %60 = dma.done [#allocation3], 256
    $region57: #{tpu_custom_call.1} parent=1 // pred_fallthru
      _
    %v62 = vld [vmem:[%s0] sm:$0x3]
    %v63 = vld [vmem:[%s0 + $0x2] sm:$0x3]
    %v64 = vld [vmem:[%s0 + $0x4] sm:$0x3]
    %v65 = vld [vmem:[%s0 + $0x6] sm:$0x3]
    %v66 = vld [vmem:[%s0 + $0x8] sm:$0x3]
    %v67 = vld [vmem:[%s0 + $0xa] sm:$0x3]
    %v68 = vld [vmem:[%s0 + $0xc] sm:$0x3]
    %v69 = vld [vmem:[%s0 + $0xe] sm:$0x3]
    %78 = vst [vmem:[#allocation1] ss:$4 sm:$0xff] %v62
    %s79 = scalar_lea.vmem [#allocation1], 1
    %80 = vst [vmem:[%s79] ss:$4 sm:$0xff] %v63
    %s81 = scalar_lea.vmem [#allocation1], 2
    %82 = vst [vmem:[%s81] ss:$4 sm:$0xff] %v64
    %s83 = scalar_lea.vmem [#allocation1], 3
    %84 = vst [vmem:[%s83] ss:$4 sm:$0xff] %v65
    %s85 = scalar_lea.vmem [#allocation1], 32
    %86 = vst [vmem:[%s85] ss:$4 sm:$0xff] %v66
    %s87 = scalar_lea.vmem [#allocation1], 33
    %88 = vst [vmem:[%s87] ss:$4 sm:$0xff] %v67
    %s89 = scalar_lea.vmem [#allocation1], 34
    %90 = vst [vmem:[%s89] ss:$4 sm:$0xff] %v68
    %s91 = scalar_lea.vmem [#allocation1], 35
    %92 = vst [vmem:[%s91] ss:$4 sm:$0xff] %v69
    %v93 = vld.sshfl [vmem:[#allocation1] sm:$0xff pattern:$0x73625140]
    %v94 = vld.sshfl [vmem:[#allocation1 + $0x20] sm:$0xff pattern:$0x73625140]
    %v97 = vpack.c.bf16 %v94, %v93
    %v98 = vld [vmem:[%s1] sm:$0xf]
    %v99 = vld [vmem:[%s1 + $0x4] sm:$0xf]
    %v100 = vld [vmem:[%s1 + $0x8] sm:$0xf]
    %v101 = vld [vmem:[%s1 + $0xc] sm:$0xf]
    %v102 = vld [vmem:[%s2] sm:$0x1]
    %v104 = vperm.slane %v102, 0
    %v110 = vunpack.c.l.b16 %v98
    %v111 = vunpack.c.l.b16 %v99
    %v112 = vunpack.c.l.b16 %v100
    %v113 = vunpack.c.l.b16 %v101
    %v114 = vpack.c.b16 %v111, %v110
    %v115 = vpack.c.b16 %v113, %v112
    %vm118 = vcmask 261120
    %v120 = vsel %vm118, %v97, 0
    %122 = vmatpush.bf16.msra.mxu0 0
    %123 = vmatpush.bf16.msra.mxu0 0
    %124 = vmatpush.bf16.msra.mxu0 0
    %125 = vmatpush.bf16.msra.mxu0 0
    %126 = vmatpush.bf16.msra.mxu0 0
    %127 = vmatpush.bf16.msra.mxu0 0
    %128 = vmatpush.bf16.msra.mxu0 %v115
    %129 = vmatpush.bf16.msra.mxu0 %v114
    %130 = vmatmul.bf16.gmra.mxu0 %v120
    %v131 = vpop.f32.mrf.mxu0
    %v132 = vadd.f32 %v104, %v131
    %v133 = vpop.f32.mrf.mxu0
    %v134 = vadd.f32 %v104, %v133
    %135 = vdwg.mxu0
    %v138 = vrot.slane %v132, 2
    %v139 = vrot.slane %v132, 4
    %v140 = vrot.slane %v132, 6
    %v141 = vrot.slane %v134, 2
    %v142 = vrot.slane %v134, 4
    %v143 = vrot.slane %v134, 6
    %v150 = vld [vmem:[%s3] sm:$0xf]
    %v151 = vld [vmem:[%s3 + $0x4] sm:$0xf]
    %v152 = vld [vmem:[%s3 + $0x8] sm:$0xf]
    %v153 = vld [vmem:[%s3 + $0xc] sm:$0xf]
    %v154 = vpack.c.bf16 %v132, %v132
    %v155 = vpack.c.bf16 %v138, %v138
    %v156 = vpack.c.bf16 %v139, %v139
    %v157 = vpack.c.bf16 %v140, %v140
    %v158 = vpack.c.bf16 %v134, %v134
    %v159 = vpack.c.bf16 %v141, %v141
    %v160 = vpack.c.bf16 %v142, %v142
    %v161 = vpack.c.bf16 %v143, %v143
    %v170 = vunpack.c.l.b16 %v154
    %v171 = vunpack.c.l.b16 %v155
    %v172 = vunpack.c.l.b16 %v156
    %v173 = vunpack.c.l.b16 %v157
    %v174 = vunpack.c.l.b16 %v158
    %v175 = vunpack.c.l.b16 %v159
    %v176 = vunpack.c.l.b16 %v160
    %v177 = vunpack.c.l.b16 %v161
    %v178 = vrot.slane %v171, 7
    %vm179 = vcmask 1041409
    %v180 = vsel %vm179, %v178, %v170
    %v181 = vrot.slane %v172, 6
    %vm182 = vcmask 1042434
    %v183 = vsel %vm182, %v181, %v180
    %v184 = vrot.slane %v173, 5
    %vm185 = vcmask 1043459
    %v186 = vsel %vm185, %v184, %v183
    %v187 = vrot.slane %v174, 4
    %vm188 = vcmask 1044484
    %v189 = vsel %vm188, %v187, %v186
    %v190 = vrot.slane %v175, 3
    %vm191 = vcmask 1045509
    %v192 = vsel %vm191, %v190, %v189
    %v193 = vrot.slane %v176, 2
    %vm194 = vcmask 1046534
    %v195 = vsel %vm194, %v193, %v192
    %v196 = vrot.slane %v177, 1
    %vm197 = vcmask 1047559
    %v198 = vsel %vm197, %v196, %v195
    %v199 = vpack.c.b16 %v198, %v198
    %200 = vrot.lane.b32.xlu0 %v199, 96
    %v201 = vpop.permute.xlu0 %200
    %vm202 = vcmask 64512
    %v204 = vsel %vm202, %v199, 0
    %v207 = vsel %vm202, %v201, 0
    %209 = vmatpush.bf16.xpose.msra.mxu0 0
    %210 = vmatpush.bf16.xpose.msra.mxu0 0
    %211 = vmatpush.bf16.xpose.msra.mxu0 0
    %212 = vmatpush.bf16.xpose.msra.mxu0 0
    %213 = vmatpush.bf16.xpose.msra.mxu0 0
    %214 = vmatpush.bf16.xpose.msra.mxu0 0
    %215 = vmatpush.bf16.xpose.msra.mxu0 0
    %216 = vmatpush.bf16.xpose.msra.mxu0 %v207
    %217 = vmatmul.bf16.gmra.mxu0 %v204
    %v218 = vpop.f32.mrf.mxu0
    %v219 = vadd.f32 0.0, %v218
    %v220 = vpop.f32.mrf.mxu0
    %221 = vdwg.mxu0
    %v222 = vsel %vm202, %v219, -inf
    %223 = vmax.xlane.f32.xlu0 %v222
    %v224 = vpop.xlane.xlu0 %223
    %v225 = vsub.f32 %v219, %v224
    %v226 = vmul.f32 %v225, 1.442695
    %v227 = vpow.pop %v226
    %v228 = vsel %vm202, %v227, 0.0
    %229 = vadd.xlane.f32.xlu0 %v228
    %v230 = vpop.xlane.xlu0 %229
    %v231 = vrcp.pop %v230
    %v232 = vmul.f32 %v227, %v231
    %v233 = vpack.c.bf16 %v232, %v232
    %234 = vrot.lane.b32.xlu0 %v199, 64
    %v235 = vpop.permute.xlu0 %234
    %v237 = vsel %vm202, %v233, 0
    %vm239 = vcmask 1043456
    %v241 = vsel %vm239, %v235, 0
    %243 = vmatpush.bf16.msra.mxu0 0
    %244 = vmatpush.bf16.msra.mxu0 0
    %245 = vmatpush.bf16.msra.mxu0 0
    %246 = vmatpush.bf16.msra.mxu0 0
    %247 = vmatpush.bf16.msra.mxu0 0
    %248 = vmatpush.bf16.msra.mxu0 0
    %249 = vmatpush.bf16.msra.mxu0 0
    %250 = vmatpush.bf16.msra.mxu0 %v241
    %251 = vmatmul.bf16.gmra.mxu0 %v237
    %v252 = vpop.f32.mrf.mxu0
    %v253 = vadd.f32 0.0, %v252
    %v254 = vpop.f32.mrf.mxu0
    %255 = vdwg.mxu0
    %v256 = vpack.c.bf16 %v253, %v253
    %257 = vrot.lane.b32.xlu0 %v199, 120
    %v258 = vpop.permute.xlu0 %257
    %259 = vrot.lane.b32.xlu0 %v199, 88
    %v260 = vpop.permute.xlu0 %259
    %v262 = vsel %vm202, %v258, 0
    %v265 = vsel %vm202, %v260, 0
    %267 = vmatpush.bf16.xpose.msra.mxu0 0
    %268 = vmatpush.bf16.xpose.msra.mxu0 0
    %269 = vmatpush.bf16.xpose.msra.mxu0 0
    %270 = vmatpush.bf16.xpose.msra.mxu0 0
    %271 = vmatpush.bf16.xpose.msra.mxu0 0
    %272 = vmatpush.bf16.xpose.msra.mxu0 0
    %273 = vmatpush.bf16.xpose.msra.mxu0 0
    %274 = vmatpush.bf16.xpose.msra.mxu0 %v265
    %275 = vmatmul.bf16.gmra.mxu0 %v262
    %v276 = vpop.f32.mrf.mxu0
    %v277 = vadd.f32 0.0, %v276
    %v278 = vpop.f32.mrf.mxu0
    %279 = vdwg.mxu0
    %v280 = vsel %vm202, %v277, -inf
    %281 = vmax.xlane.f32.xlu0 %v280
    %v282 = vpop.xlane.xlu0 %281
    %v283 = vsub.f32 %v277, %v282
    %v284 = vmul.f32 %v283, 1.442695
    %v285 = vpow.pop %v284
    %v286 = vsel %vm202, %v285, 0.0
    %287 = vadd.xlane.f32.xlu0 %v286
    %v288 = vpop.xlane.xlu0 %287
    %v289 = vrcp.pop %v288
    %v290 = vmul.f32 %v285, %v289
    %v291 = vpack.c.bf16 %v290, %v290
    %292 = vrot.lane.b32.xlu0 %v199, 56
    %v293 = vpop.permute.xlu0 %292
    %v295 = vsel %vm202, %v291, 0
    %v298 = vsel %vm239, %v293, 0
    %300 = vmatpush.bf16.msra.mxu0 0
    %301 = vmatpush.bf16.msra.mxu0 0
    %302 = vmatpush.bf16.msra.mxu0 0
    %303 = vmatpush.bf16.msra.mxu0 0
    %304 = vmatpush.bf16.msra.mxu0 0
    %305 = vmatpush.bf16.msra.mxu0 0
    %306 = vmatpush.bf16.msra.mxu0 0
    %307 = vmatpush.bf16.msra.mxu0 %v298
    %308 = vmatmul.bf16.gmra.mxu0 %v295
    %v309 = vpop.f32.mrf.mxu0
    %v310 = vadd.f32 0.0, %v309
    %v311 = vpop.f32.mrf.mxu0
    %312 = vdwg.mxu0
    %v313 = vpack.c.bf16 %v310, %v310
    %v315 = vsel %vm202, %v313, 0
    %v318 = vsel %vm239, %v151, 0
    %320 = vmatpush.bf16.msra.mxu0 0
    %321 = vmatpush.bf16.msra.mxu0 0
    %322 = vmatpush.bf16.msra.mxu0 0
    %323 = vmatpush.bf16.msra.mxu0 0
    %324 = vmatpush.bf16.msra.mxu0 0
    %325 = vmatpush.bf16.msra.mxu0 0
    %326 = vmatpush.bf16.msra.mxu0 0
    %327 = vmatpush.bf16.msra.mxu0 %v318
    %328 = vmatmul.bf16.gmra.mxu0 %v315
    %v329 = vpop.f32.mrf.mxu0
    %v330 = vadd.f32 0.0, %v329
    %v331 = vpop.f32.mrf.mxu0
    %332 = vdwg.mxu0
    %v334 = vsel %vm202, %v256, 0
    %v337 = vsel %vm239, %v150, 0
    %339 = vmatpush.bf16.msra.mxu0 0
    %340 = vmatpush.bf16.msra.mxu0 0
    %341 = vmatpush.bf16.msra.mxu0 0
    %342 = vmatpush.bf16.msra.mxu0 0
    %343 = vmatpush.bf16.msra.mxu0 0
    %344 = vmatpush.bf16.msra.mxu0 0
    %345 = vmatpush.bf16.msra.mxu0 0
    %346 = vmatpush.bf16.msra.mxu0 %v337
    %347 = vmatmul.bf16.gmra.mxu0 %v334
    %v348 = vpop.f32.mrf.mxu0
    %v349 = vadd.f32 %v330, %v348
    %v350 = vpop.f32.mrf.mxu0
    %351 = vdwg.mxu0
    %352 = vrot.lane.b32.xlu0 %v199, 112
    %v353 = vpop.permute.xlu0 %352
    %354 = vrot.lane.b32.xlu0 %v199, 80
    %v355 = vpop.permute.xlu0 %354
    %v357 = vsel %vm202, %v353, 0
    %v360 = vsel %vm202, %v355, 0
    %362 = vmatpush.bf16.xpose.msra.mxu0 0
    %363 = vmatpush.bf16.xpose.msra.mxu0 0
    %364 = vmatpush.bf16.xpose.msra.mxu0 0
    %365 = vmatpush.bf16.xpose.msra.mxu0 0
    %366 = vmatpush.bf16.xpose.msra.mxu0 0
    %367 = vmatpush.bf16.xpose.msra.mxu0 0
    %368 = vmatpush.bf16.xpose.msra.mxu0 0
    %369 = vmatpush.bf16.xpose.msra.mxu0 %v360
    %370 = vmatmul.bf16.gmra.mxu0 %v357
    %v371 = vpop.f32.mrf.mxu0
    %v372 = vadd.f32 0.0, %v371
    %v373 = vpop.f32.mrf.mxu0
    %374 = vdwg.mxu0
    %v375 = vsel %vm202, %v372, -inf
    %376 = vmax.xlane.f32.xlu0 %v375
    %v377 = vpop.xlane.xlu0 %376
    %v378 = vsub.f32 %v372, %v377
    %v379 = vmul.f32 %v378, 1.442695
    %v380 = vpow.pop %v379
    %v381 = vsel %vm202, %v380, 0.0
    %382 = vadd.xlane.f32.xlu0 %v381
    %v383 = vpop.xlane.xlu0 %382
    %v384 = vrcp.pop %v383
    %v385 = vmul.f32 %v380, %v384
    %v386 = vpack.c.bf16 %v385, %v385
    %387 = vrot.lane.b32.xlu0 %v199, 48
    %v388 = vpop.permute.xlu0 %387
    %v390 = vsel %vm202, %v386, 0
    %v393 = vsel %vm239, %v388, 0
    %395 = vmatpush.bf16.msra.mxu0 0
    %396 = vmatpush.bf16.msra.mxu0 0
    %397 = vmatpush.bf16.msra.mxu0 0
    %398 = vmatpush.bf16.msra.mxu0 0
    %399 = vmatpush.bf16.msra.mxu0 0
    %400 = vmatpush.bf16.msra.mxu0 0
    %401 = vmatpush.bf16.msra.mxu0 0
    %402 = vmatpush.bf16.msra.mxu0 %v393
    %403 = vmatmul.bf16.gmra.mxu0 %v390
    %v404 = vpop.f32.mrf.mxu0
    %v405 = vadd.f32 0.0, %v404
    %v406 = vpop.f32.mrf.mxu0
    %407 = vdwg.mxu0
    %v408 = vpack.c.bf16 %v405, %v405
    %v410 = vsel %vm202, %v408, 0
    %v413 = vsel %vm239, %v152, 0
    %415 = vmatpush.bf16.msra.mxu0 0
    %416 = vmatpush.bf16.msra.mxu0 0
    %417 = vmatpush.bf16.msra.mxu0 0
    %418 = vmatpush.bf16.msra.mxu0 0
    %419 = vmatpush.bf16.msra.mxu0 0
    %420 = vmatpush.bf16.msra.mxu0 0
    %421 = vmatpush.bf16.msra.mxu0 0
    %422 = vmatpush.bf16.msra.mxu0 %v413
    %423 = vmatmul.bf16.gmra.mxu0 %v410
    %v424 = vpop.f32.mrf.mxu0
    %v425 = vadd.f32 0.0, %v424
    %v426 = vpop.f32.mrf.mxu0
    %427 = vdwg.mxu0
    %v428 = vadd.f32 %v349, %v425
    %429 = vrot.lane.b32.xlu0 %v199, 104
    %v430 = vpop.permute.xlu0 %429
    %431 = vrot.lane.b32.xlu0 %v199, 72
    %v432 = vpop.permute.xlu0 %431
    %v434 = vsel %vm202, %v430, 0
    %v437 = vsel %vm202, %v432, 0
    %439 = vmatpush.bf16.xpose.msra.mxu0 0
    %440 = vmatpush.bf16.xpose.msra.mxu0 0
    %441 = vmatpush.bf16.xpose.msra.mxu0 0
    %442 = vmatpush.bf16.xpose.msra.mxu0 0
    %443 = vmatpush.bf16.xpose.msra.mxu0 0
    %444 = vmatpush.bf16.xpose.msra.mxu0 0
    %445 = vmatpush.bf16.xpose.msra.mxu0 0
    %446 = vmatpush.bf16.xpose.msra.mxu0 %v437
    %447 = vmatmul.bf16.gmra.mxu0 %v434
    %v448 = vpop.f32.mrf.mxu0
    %v449 = vadd.f32 0.0, %v448
    %v450 = vpop.f32.mrf.mxu0
    %451 = vdwg.mxu0
    %v452 = vsel %vm202, %v449, -inf
    %453 = vmax.xlane.f32.xlu0 %v452
    %v454 = vpop.xlane.xlu0 %453
    %v455 = vsub.f32 %v449, %v454
    %v456 = vmul.f32 %v455, 1.442695
    %v457 = vpow.pop %v456
    %v458 = vsel %vm202, %v457, 0.0
    %459 = vadd.xlane.f32.xlu0 %v458
    %v460 = vpop.xlane.xlu0 %459
    %v461 = vrcp.pop %v460
    %v462 = vmul.f32 %v457, %v461
    %v463 = vpack.c.bf16 %v462, %v462
    %464 = vrot.lane.b32.xlu0 %v199, 40
    %v465 = vpop.permute.xlu0 %464
    %v467 = vsel %vm202, %v463, 0
    %v470 = vsel %vm239, %v465, 0
    %472 = vmatpush.bf16.msra.mxu0 0
    %473 = vmatpush.bf16.msra.mxu0 0
    %474 = vmatpush.bf16.msra.mxu0 0
    %475 = vmatpush.bf16.msra.mxu0 0
    %476 = vmatpush.bf16.msra.mxu0 0
    %477 = vmatpush.bf16.msra.mxu0 0
    %478 = vmatpush.bf16.msra.mxu0 0
    %479 = vmatpush.bf16.msra.mxu0 %v470
    %480 = vmatmul.bf16.gmra.mxu0 %v467
    %v481 = vpop.f32.mrf.mxu0
    %v482 = vadd.f32 0.0, %v481
    %v483 = vpop.f32.mrf.mxu0
    %484 = vdwg.mxu0
    %v485 = vpack.c.bf16 %v482, %v482
    %v487 = vsel %vm202, %v485, 0
    %v490 = vsel %vm239, %v153, 0
    %492 = vmatpush.bf16.msra.mxu0 0
    %493 = vmatpush.bf16.msra.mxu0 0
    %494 = vmatpush.bf16.msra.mxu0 0
    %495 = vmatpush.bf16.msra.mxu0 0
    %496 = vmatpush.bf16.msra.mxu0 0
    %497 = vmatpush.bf16.msra.mxu0 0
    %498 = vmatpush.bf16.msra.mxu0 0
    %499 = vmatpush.bf16.msra.mxu0 %v490
    %500 = vmatmul.bf16.gmra.mxu0 %v487
    %v501 = vpop.f32.mrf.mxu0
    %v502 = vadd.f32 0.0, %v501
    %v503 = vpop.f32.mrf.mxu0
    %504 = vdwg.mxu0
    %v505 = vadd.f32 %v428, %v502
    %v507 = vrot.slane %v505, 1
    %v508 = vrot.slane %v505, 2
    %v509 = vrot.slane %v505, 3
    %v510 = vrot.slane %v505, 4
    %v511 = vrot.slane %v505, 5
    %v512 = vrot.slane %v505, 6
    %v513 = vrot.slane %v505, 7
    %v521 = vrot.slane %v170, 1
    %v522 = vsel %vm179, %v171, %v521
    %v523 = vrot.slane %v172, 7
    %v524 = vsel %vm182, %v523, %v522
    %v525 = vrot.slane %v173, 6
    %v526 = vsel %vm185, %v525, %v524
    %v527 = vrot.slane %v174, 5
    %v528 = vsel %vm188, %v527, %v526
    %v529 = vrot.slane %v175, 4
    %v530 = vsel %vm191, %v529, %v528
    %v531 = vrot.slane %v176, 3
    %v532 = vsel %vm194, %v531, %v530
    %v533 = vrot.slane %v177, 2
    %v534 = vsel %vm197, %v533, %v532
    %v535 = vpack.c.b16 %v534, %v534
    %536 = vrot.lane.b32.xlu0 %v535, 96
    %v537 = vpop.permute.xlu0 %536
    %v539 = vsel %vm202, %v535, 0
    %v542 = vsel %vm202, %v537, 0
    %544 = vmatpush.bf16.xpose.msra.mxu0 0
    %545 = vmatpush.bf16.xpose.msra.mxu0 0
    %546 = vmatpush.bf16.xpose.msra.mxu0 0
    %547 = vmatpush.bf16.xpose.msra.mxu0 0
    %548 = vmatpush.bf16.xpose.msra.mxu0 0
    %549 = vmatpush.bf16.xpose.msra.mxu0 0
    %550 = vmatpush.bf16.xpose.msra.mxu0 0
    %551 = vmatpush.bf16.xpose.msra.mxu0 %v542
    %552 = vmatmul.bf16.gmra.mxu0 %v539
    %v553 = vpop.f32.mrf.mxu0
    %v554 = vadd.f32 0.0, %v553
    %v555 = vpop.f32.mrf.mxu0
    %556 = vdwg.mxu0
    %v557 = vsel %vm202, %v554, -inf
    %558 = vmax.xlane.f32.xlu0 %v557
    %v559 = vpop.xlane.xlu0 %558
    %v560 = vsub.f32 %v554, %v559
    %v561 = vmul.f32 %v560, 1.442695
    %v562 = vpow.pop %v561
    %v563 = vsel %vm202, %v562, 0.0
    %564 = vadd.xlane.f32.xlu0 %v563
    %v565 = vpop.xlane.xlu0 %564
    %v566 = vrcp.pop %v565
    %v567 = vmul.f32 %v562, %v566
    %v568 = vpack.c.bf16 %v567, %v567
    %569 = vrot.lane.b32.xlu0 %v535, 64
    %v570 = vpop.permute.xlu0 %569
    %v572 = vsel %vm202, %v568, 0
    %v575 = vsel %vm239, %v570, 0
    %577 = vmatpush.bf16.msra.mxu0 0
    %578 = vmatpush.bf16.msra.mxu0 0
    %579 = vmatpush.bf16.msra.mxu0 0
    %580 = vmatpush.bf16.msra.mxu0 0
    %581 = vmatpush.bf16.msra.mxu0 0
    %582 = vmatpush.bf16.msra.mxu0 0
    %583 = vmatpush.bf16.msra.mxu0 0
    %584 = vmatpush.bf16.msra.mxu0 %v575
    %585 = vmatmul.bf16.gmra.mxu0 %v572
    %v586 = vpop.f32.mrf.mxu0
    %v587 = vadd.f32 0.0, %v586
    %v588 = vpop.f32.mrf.mxu0
    %589 = vdwg.mxu0
    %v590 = vpack.c.bf16 %v587, %v587
    %591 = vrot.lane.b32.xlu0 %v535, 120
    %v592 = vpop.permute.xlu0 %591
    %593 = vrot.lane.b32.xlu0 %v535, 88
    %v594 = vpop.permute.xlu0 %593
    %v596 = vsel %vm202, %v592, 0
    %v599 = vsel %vm202, %v594, 0
    %601 = vmatpush.bf16.xpose.msra.mxu0 0
    %602 = vmatpush.bf16.xpose.msra.mxu0 0
    %603 = vmatpush.bf16.xpose.msra.mxu0 0
    %604 = vmatpush.bf16.xpose.msra.mxu0 0
    %605 = vmatpush.bf16.xpose.msra.mxu0 0
    %606 = vmatpush.bf16.xpose.msra.mxu0 0
    %607 = vmatpush.bf16.xpose.msra.mxu0 0
    %608 = vmatpush.bf16.xpose.msra.mxu0 %v599
    %609 = vmatmul.bf16.gmra.mxu0 %v596
    %v610 = vpop.f32.mrf.mxu0
    %v611 = vadd.f32 0.0, %v610
    %v612 = vpop.f32.mrf.mxu0
    %613 = vdwg.mxu0
    %v614 = vsel %vm202, %v611, -inf
    %615 = vmax.xlane.f32.xlu0 %v614
    %v616 = vpop.xlane.xlu0 %615
    %v617 = vsub.f32 %v611, %v616
    %v618 = vmul.f32 %v617, 1.442695
    %v619 = vpow.pop %v618
    %v620 = vsel %vm202, %v619, 0.0
    %621 = vadd.xlane.f32.xlu0 %v620
    %v622 = vpop.xlane.xlu0 %621
    %v623 = vrcp.pop %v622
    %v624 = vmul.f32 %v619, %v623
    %v625 = vpack.c.bf16 %v624, %v624
    %626 = vrot.lane.b32.xlu0 %v535, 56
    %v627 = vpop.permute.xlu0 %626
    %v629 = vsel %vm202, %v625, 0
    %v632 = vsel %vm239, %v627, 0
    %634 = vmatpush.bf16.msra.mxu0 0
    %635 = vmatpush.bf16.msra.mxu0 0
    %636 = vmatpush.bf16.msra.mxu0 0
    %637 = vmatpush.bf16.msra.mxu0 0
    %638 = vmatpush.bf16.msra.mxu0 0
    %639 = vmatpush.bf16.msra.mxu0 0
    %640 = vmatpush.bf16.msra.mxu0 0
    %641 = vmatpush.bf16.msra.mxu0 %v632
    %642 = vmatmul.bf16.gmra.mxu0 %v629
    %v643 = vpop.f32.mrf.mxu0
    %v644 = vadd.f32 0.0, %v643
    %v645 = vpop.f32.mrf.mxu0
    %646 = vdwg.mxu0
    %v647 = vpack.c.bf16 %v644, %v644
    %v649 = vsel %vm202, %v647, 0
    %651 = vmatpush.bf16.msra.mxu0 0
    %652 = vmatpush.bf16.msra.mxu0 0
    %653 = vmatpush.bf16.msra.mxu0 0
    %654 = vmatpush.bf16.msra.mxu0 0
    %655 = vmatpush.bf16.msra.mxu0 0
    %656 = vmatpush.bf16.msra.mxu0 0
    %657 = vmatpush.bf16.msra.mxu0 0
    %658 = vmatpush.bf16.msra.mxu0 %v318
    %659 = vmatmul.bf16.gmra.mxu0 %v649
    %v660 = vpop.f32.mrf.mxu0
    %v661 = vadd.f32 0.0, %v660
    %v662 = vpop.f32.mrf.mxu0
    %663 = vdwg.mxu0
    %v665 = vsel %vm202, %v590, 0
    %667 = vmatpush.bf16.msra.mxu0 0
    %668 = vmatpush.bf16.msra.mxu0 0
    %669 = vmatpush.bf16.msra.mxu0 0
    %670 = vmatpush.bf16.msra.mxu0 0
    %671 = vmatpush.bf16.msra.mxu0 0
    %672 = vmatpush.bf16.msra.mxu0 0
    %673 = vmatpush.bf16.msra.mxu0 0
    %674 = vmatpush.bf16.msra.mxu0 %v337
    %675 = vmatmul.bf16.gmra.mxu0 %v665
    %v676 = vpop.f32.mrf.mxu0
    %v677 = vadd.f32 %v661, %v676
    %v678 = vpop.f32.mrf.mxu0
    %679 = vdwg.mxu0
    %680 = vrot.lane.b32.xlu0 %v535, 112
    %v681 = vpop.permute.xlu0 %680
    %682 = vrot.lane.b32.xlu0 %v535, 80
    %v683 = vpop.permute.xlu0 %682
    %v685 = vsel %vm202, %v681, 0
    %v688 = vsel %vm202, %v683, 0
    %690 = vmatpush.bf16.xpose.msra.mxu0 0
    %691 = vmatpush.bf16.xpose.msra.mxu0 0
    %692 = vmatpush.bf16.xpose.msra.mxu0 0
    %693 = vmatpush.bf16.xpose.msra.mxu0 0
    %694 = vmatpush.bf16.xpose.msra.mxu0 0
    %695 = vmatpush.bf16.xpose.msra.mxu0 0
    %696 = vmatpush.bf16.xpose.msra.mxu0 0
    %697 = vmatpush.bf16.xpose.msra.mxu0 %v688
    %698 = vmatmul.bf16.gmra.mxu0 %v685
    %v699 = vpop.f32.mrf.mxu0
    %v700 = vadd.f32 0.0, %v699
    %v701 = vpop.f32.mrf.mxu0
    %702 = vdwg.mxu0
    %v703 = vsel %vm202, %v700, -inf
    %704 = vmax.xlane.f32.xlu0 %v703
    %v705 = vpop.xlane.xlu0 %704
    %v706 = vsub.f32 %v700, %v705
    %v707 = vmul.f32 %v706, 1.442695
    %v708 = vpow.pop %v707
    %v709 = vsel %vm202, %v708, 0.0
    %710 = vadd.xlane.f32.xlu0 %v709
    %v711 = vpop.xlane.xlu0 %710
    %v712 = vrcp.pop %v711
    %v713 = vmul.f32 %v708, %v712
    %v714 = vpack.c.bf16 %v713, %v713
    %715 = vrot.lane.b32.xlu0 %v535, 48
    %v716 = vpop.permute.xlu0 %715
    %v718 = vsel %vm202, %v714, 0
    %v721 = vsel %vm239, %v716, 0
    %723 = vmatpush.bf16.msra.mxu0 0
    %724 = vmatpush.bf16.msra.mxu0 0
    %725 = vmatpush.bf16.msra.mxu0 0
    %726 = vmatpush.bf16.msra.mxu0 0
    %727 = vmatpush.bf16.msra.mxu0 0
    %728 = vmatpush.bf16.msra.mxu0 0
    %729 = vmatpush.bf16.msra.mxu0 0
    %730 = vmatpush.bf16.msra.mxu0 %v721
    %731 = vmatmul.bf16.gmra.mxu0 %v718
    %v732 = vpop.f32.mrf.mxu0
    %v733 = vadd.f32 0.0, %v732
    %v734 = vpop.f32.mrf.mxu0
    %735 = vdwg.mxu0
    %v736 = vpack.c.bf16 %v733, %v733
    %v738 = vsel %vm202, %v736, 0
    %740 = vmatpush.bf16.msra.mxu0 0
    %741 = vmatpush.bf16.msra.mxu0 0
    %742 = vmatpush.bf16.msra.mxu0 0
    %743 = vmatpush.bf16.msra.mxu0 0
    %744 = vmatpush.bf16.msra.mxu0 0
    %745 = vmatpush.bf16.msra.mxu0 0
    %746 = vmatpush.bf16.msra.mxu0 0
    %747 = vmatpush.bf16.msra.mxu0 %v413
    %748 = vmatmul.bf16.gmra.mxu0 %v738
    %v749 = vpop.f32.mrf.mxu0
    %v750 = vadd.f32 0.0, %v749
    %v751 = vpop.f32.mrf.mxu0
    %752 = vdwg.mxu0
    %v753 = vadd.f32 %v677, %v750
    %754 = vrot.lane.b32.xlu0 %v535, 104
    %v755 = vpop.permute.xlu0 %754
    %756 = vrot.lane.b32.xlu0 %v535, 72
    %v757 = vpop.permute.xlu0 %756
    %v759 = vsel %vm202, %v755, 0
    %v762 = vsel %vm202, %v757, 0
    %764 = vmatpush.bf16.xpose.msra.mxu0 0
    %765 = vmatpush.bf16.xpose.msra.mxu0 0
    %766 = vmatpush.bf16.xpose.msra.mxu0 0
    %767 = vmatpush.bf16.xpose.msra.mxu0 0
    %768 = vmatpush.bf16.xpose.msra.mxu0 0
    %769 = vmatpush.bf16.xpose.msra.mxu0 0
    %770 = vmatpush.bf16.xpose.msra.mxu0 0
    %771 = vmatpush.bf16.xpose.msra.mxu0 %v762
    %772 = vmatmul.bf16.gmra.mxu0 %v759
    %v773 = vpop.f32.mrf.mxu0
    %v774 = vadd.f32 0.0, %v773
    %v775 = vpop.f32.mrf.mxu0
    %776 = vdwg.mxu0
    %v777 = vsel %vm202, %v774, -inf
    %778 = vmax.xlane.f32.xlu0 %v777
    %v779 = vpop.xlane.xlu0 %778
    %v780 = vsub.f32 %v774, %v779
    %v781 = vmul.f32 %v780, 1.442695
    %v782 = vpow.pop %v781
    %v783 = vsel %vm202, %v782, 0.0
    %784 = vadd.xlane.f32.xlu0 %v783
    %v785 = vpop.xlane.xlu0 %784
    %v786 = vrcp.pop %v785
    %v787 = vmul.f32 %v782, %v786
    %v788 = vpack.c.bf16 %v787, %v787
    %789 = vrot.lane.b32.xlu0 %v535, 40
    %v790 = vpop.permute.xlu0 %789
    %v792 = vsel %vm202, %v788, 0
    %v795 = vsel %vm239, %v790, 0
    %797 = vmatpush.bf16.msra.mxu0 0
    %798 = vmatpush.bf16.msra.mxu0 0
    %799 = vmatpush.bf16.msra.mxu0 0
    %800 = vmatpush.bf16.msra.mxu0 0
    %801 = vmatpush.bf16.msra.mxu0 0
    %802 = vmatpush.bf16.msra.mxu0 0
    %803 = vmatpush.bf16.msra.mxu0 0
    %804 = vmatpush.bf16.msra.mxu0 %v795
    %805 = vmatmul.bf16.gmra.mxu0 %v792
    %v806 = vpop.f32.mrf.mxu0
    %v807 = vadd.f32 0.0, %v806
    %v808 = vpop.f32.mrf.mxu0
    %809 = vdwg.mxu0
    %v810 = vpack.c.bf16 %v807, %v807
    %v812 = vsel %vm202, %v810, 0
    %814 = vmatpush.bf16.msra.mxu0 0
    %815 = vmatpush.bf16.msra.mxu0 0
    %816 = vmatpush.bf16.msra.mxu0 0
    %817 = vmatpush.bf16.msra.mxu0 0
    %818 = vmatpush.bf16.msra.mxu0 0
    %819 = vmatpush.bf16.msra.mxu0 0
    %820 = vmatpush.bf16.msra.mxu0 0
    %821 = vmatpush.bf16.msra.mxu0 %v490
    %822 = vmatmul.bf16.gmra.mxu0 %v812
    %v823 = vpop.f32.mrf.mxu0
    %v824 = vadd.f32 0.0, %v823
    %v825 = vpop.f32.mrf.mxu0
    %826 = vdwg.mxu0
    %v827 = vadd.f32 %v753, %v824
    %v829 = vrot.slane %v827, 1
    %v830 = vrot.slane %v827, 2
    %v831 = vrot.slane %v827, 3
    %v832 = vrot.slane %v827, 4
    %v833 = vrot.slane %v827, 5
    %v834 = vrot.slane %v827, 6
    %v835 = vrot.slane %v827, 7
    %v836 = vperm.slane %v827, 0
    %v837 = vperm.slane %v829, 0
    %v838 = vperm.slane %v830, 0
    %v839 = vperm.slane %v831, 0
    %v840 = vperm.slane %v832, 0
    %v841 = vperm.slane %v833, 0
    %v842 = vperm.slane %v834, 0
    %v843 = vperm.slane %v835, 0
    %vm852 = vcmask 1040384
    %v853 = vsel %vm852, %v505, %v836
    %v854 = vsel %vm852, %v507, %v837
    %v855 = vsel %vm852, %v508, %v838
    %v856 = vsel %vm852, %v509, %v839
    %v857 = vsel %vm852, %v510, %v840
    %v858 = vsel %vm852, %v511, %v841
    %v859 = vsel %vm852, %v512, %v842
    %v860 = vsel %vm852, %v513, %v843
    %v861 = vld [vmem:[%s4] sm:$0x1]
    %v863 = vperm.slane %v861, 0
    %v865 = vrot.slane %v863, 2
    %v866 = vrot.slane %v863, 4
    %v867 = vrot.slane %v863, 6
    %v871 = vadd.f32 %v853, %v863
    %v872 = vadd.f32 %v854, %v865
    %v873 = vadd.f32 %v855, %v866
    %v874 = vadd.f32 %v856, %v867
    %v875 = vadd.f32 %v857, %v863
    %v876 = vadd.f32 %v858, %v865
    %v877 = vadd.f32 %v859, %v866
    %v878 = vadd.f32 %v860, %v867
    %v879 = vadd.f32 %v62, %v871
    %v880 = vadd.f32 %v63, %v872
    %v881 = vadd.f32 %v64, %v873
    %v882 = vadd.f32 %v65, %v874
    %v883 = vadd.f32 %v66, %v875
    %v884 = vadd.f32 %v67, %v876
    %v885 = vadd.f32 %v68, %v877
    %v886 = vadd.f32 %v69, %v878
    %895 = vst [vmem:[#allocation1] ss:$4 sm:$0xff] %v879
    %s896 = scalar_lea.vmem [#allocation1], 1
    %897 = vst [vmem:[%s896] ss:$4 sm:$0xff] %v880
    %s898 = scalar_lea.vmem [#allocation1], 2
    %899 = vst [vmem:[%s898] ss:$4 sm:$0xff] %v881
    %s900 = scalar_lea.vmem [#allocation1], 3
    %901 = vst [vmem:[%s900] ss:$4 sm:$0xff] %v882
    %s902 = scalar_lea.vmem [#allocation1], 32
    %903 = vst [vmem:[%s902] ss:$4 sm:$0xff] %v883
    %s904 = scalar_lea.vmem [#allocation1], 33
    %905 = vst [vmem:[%s904] ss:$4 sm:$0xff] %v884
    %s906 = scalar_lea.vmem [#allocation1], 34
    %907 = vst [vmem:[%s906] ss:$4 sm:$0xff] %v885
    %s908 = scalar_lea.vmem [#allocation1], 35
    %909 = vst [vmem:[%s908] ss:$4 sm:$0xff] %v886
    %v910 = vld.sshfl [vmem:[#allocation1] sm:$0xff pattern:$0x73625140]
    %v911 = vld.sshfl [vmem:[#allocation1 + $0x20] sm:$0xff pattern:$0x73625140]
    %v914 = vsel %vm118, %v910, 0.0
    %915 = vadd.xlane.f32.xlu0 %v914
    %v916 = vpop.xlane.xlu0 %915
    %v917 = vsel %vm118, %v911, 0.0
    %918 = vadd.xlane.f32.xlu0 %v917
    %v919 = vpop.xlane.xlu0 %918
    %v920 = vrcp.pop 32.0
    %v921 = vmul.f32 32.0, %v920
    %v922 = vsub.f32 1.0, %v921
    %v923 = vmul.f32 %v920, %v922
    %v924 = vadd.f32 %v920, %v923
    %vm925 = vweird.f32 %v920
    %v926 = vsel %vm925, %v920, %v924
    %v927 = vmul.f32 %v916, %v926
    %v928 = vmul.f32 %v919, %v926
    %v932 = vunpack.c.l.s4 269488144
    %v933 = vunpack.c.0.s8 %v932
    %v934 = vperm.slane %v927, %v933
    %v936 = vunpack.c.l.s4 842150450
    %v937 = vunpack.c.0.s8 %v936
    %v938 = vperm.slane %v927, %v937
    %v940 = vunpack.c.l.s4 1414812756
    %v941 = vunpack.c.0.s8 %v940
    %v942 = vperm.slane %v927, %v941
    %v944 = vunpack.c.l.s4 1987475062
    %v945 = vunpack.c.0.s8 %v944
    %v946 = vperm.slane %v927, %v945
    %v948 = vunpack.c.l.s4 269488144
    %v949 = vunpack.c.0.s8 %v948
    %v950 = vperm.slane %v928, %v949
    %v952 = vunpack.c.l.s4 842150450
    %v953 = vunpack.c.0.s8 %v952
    %v954 = vperm.slane %v928, %v953
    %v956 = vunpack.c.l.s4 1414812756
    %v957 = vunpack.c.0.s8 %v956
    %v958 = vperm.slane %v928, %v957
    %v960 = vunpack.c.l.s4 1987475062
    %v961 = vunpack.c.0.s8 %v960
    %v962 = vperm.slane %v928, %v961
    %v971 = vsub.f32 %v879, %v934
    %v972 = vsub.f32 %v880, %v938
    %v973 = vsub.f32 %v881, %v942
    %v974 = vsub.f32 %v882, %v946
    %v975 = vsub.f32 %v883, %v950
    %v976 = vsub.f32 %v884, %v954
    %v977 = vsub.f32 %v885, %v958
    %v978 = vsub.f32 %v886, %v962
    %v979 = vmul.f32 %v971, %v971
    %v980 = vmul.f32 %v972, %v972
    %v981 = vmul.f32 %v973, %v973
    %v982 = vmul.f32 %v974, %v974
    %v983 = vmul.f32 %v975, %v975
    %v984 = vmul.f32 %v976, %v976
    %v985 = vmul.f32 %v977, %v977
    %v986 = vmul.f32 %v978, %v978
    %995 = vst [vmem:[#allocation1] ss:$4 sm:$0xff] %v979
    %s996 = scalar_lea.vmem [#allocation1], 1
    %997 = vst [vmem:[%s996] ss:$4 sm:$0xff] %v980
    %s998 = scalar_lea.vmem [#allocation1], 2
    %999 = vst [vmem:[%s998] ss:$4 sm:$0xff] %v981
    %s1000 = scalar_lea.vmem [#allocation1], 3
    %1001 = vst [vmem:[%s1000] ss:$4 sm:$0xff] %v982
    %s1002 = scalar_lea.vmem [#allocation1], 32
    %1003 = vst [vmem:[%s1002] ss:$4 sm:$0xff] %v983
    %s1004 = scalar_lea.vmem [#allocation1], 33
    %1005 = vst [vmem:[%s1004] ss:$4 sm:$0xff] %v984
    %s1006 = scalar_lea.vmem [#allocation1], 34
    %1007 = vst [vmem:[%s1006] ss:$4 sm:$0xff] %v985
    %s1008 = scalar_lea.vmem [#allocation1], 35
    %1009 = vst [vmem:[%s1008] ss:$4 sm:$0xff] %v986
    %v1010 = vld.sshfl [vmem:[#allocation1] sm:$0xff pattern:$0x73625140]
    %v1011 = vld.sshfl [vmem:[#allocation1 + $0x20] sm:$0xff pattern:$0x73625140]
    %v1014 = vsel %vm118, %v1010, 0.0
    %1015 = vadd.xlane.f32.xlu0 %v1014
    %v1016 = vpop.xlane.xlu0 %1015
    %v1017 = vsel %vm118, %v1011, 0.0
    %1018 = vadd.xlane.f32.xlu0 %v1017
    %v1019 = vpop.xlane.xlu0 %1018
    %v1020 = vmul.f32 %v1016, %v926
    %v1021 = vmul.f32 %v1019, %v926
    %v1022 = vadd.f32 %v1020, 1e-05
    %v1023 = vadd.f32 %v1021, 1e-05
    %v1024 = vrsqrt.pop %v1022
    %v1025 = vmul.f32 %v1024, %v1022
    %v1026 = vmul.f32 %v1025, %v1024
    %v1027 = vmul.f32 0.5, %v1026
    %v1028 = vsub.f32 1.5, %v1027
    %v1029 = vmul.f32 %v1024, %v1028
    %vm1030 = vweird.f32 %v1022
    %vm1031 = vweird.f32 %v1024
    %vm1032 = vmor %vm1030, %vm1031
    %v1033 = vsel %vm1032, %v1024, %v1029
    %v1034 = vrsqrt.pop %v1023
    %v1035 = vmul.f32 %v1034, %v1023
    %v1036 = vmul.f32 %v1035, %v1034
    %v1037 = vmul.f32 0.5, %v1036
    %v1038 = vsub.f32 1.5, %v1037
    %v1039 = vmul.f32 %v1034, %v1038
    %vm1040 = vweird.f32 %v1023
    %vm1041 = vweird.f32 %v1034
    %vm1042 = vmor %vm1040, %vm1041
    %v1043 = vsel %vm1042, %v1034, %v1039
    %v1047 = vunpack.c.l.s4 269488144
    %v1048 = vunpack.c.0.s8 %v1047
    %v1049 = vperm.slane %v1033, %v1048
    %v1051 = vunpack.c.l.s4 842150450
    %v1052 = vunpack.c.0.s8 %v1051
    %v1053 = vperm.slane %v1033, %v1052
    %v1055 = vunpack.c.l.s4 1414812756
    %v1056 = vunpack.c.0.s8 %v1055
    %v1057 = vperm.slane %v1033, %v1056
    %v1059 = vunpack.c.l.s4 1987475062
    %v1060 = vunpack.c.0.s8 %v1059
    %v1061 = vperm.slane %v1033, %v1060
    %v1063 = vunpack.c.l.s4 269488144
    %v1064 = vunpack.c.0.s8 %v1063
    %v1065 = vperm.slane %v1043, %v1064
    %v1067 = vunpack.c.l.s4 842150450
    %v1068 = vunpack.c.0.s8 %v1067
    %v1069 = vperm.slane %v1043, %v1068
    %v1071 = vunpack.c.l.s4 1414812756
    %v1072 = vunpack.c.0.s8 %v1071
    %v1073 = vperm.slane %v1043, %v1072
    %v1075 = vunpack.c.l.s4 1987475062
    %v1076 = vunpack.c.0.s8 %v1075
    %v1077 = vperm.slane %v1043, %v1076
    %v1086 = vmul.f32 %v971, %v1049
    %v1087 = vmul.f32 %v972, %v1053
    %v1088 = vmul.f32 %v973, %v1057
    %v1089 = vmul.f32 %v974, %v1061
    %v1090 = vmul.f32 %v975, %v1065
    %v1091 = vmul.f32 %v976, %v1069
    %v1092 = vmul.f32 %v977, %v1073
    %v1093 = vmul.f32 %v978, %v1077
    %v1094 = vld [vmem:[%s5] sm:$0x1]
    %v1096 = vperm.slane %v1094, 0
    %v1098 = vrot.slane %v1096, 2
    %v1099 = vrot.slane %v1096, 4
    %v1100 = vrot.slane %v1096, 6
    %v1104 = vmul.f32 %v1086, %v1096
    %v1105 = vmul.f32 %v1087, %v1098
    %v1106 = vmul.f32 %v1088, %v1099
    %v1107 = vmul.f32 %v1089, %v1100
    %v1108 = vmul.f32 %v1090, %v1096
    %v1109 = vmul.f32 %v1091, %v1098
    %v1110 = vmul.f32 %v1092, %v1099
    %v1111 = vmul.f32 %v1093, %v1100
    %v1112 = vld [vmem:[%s6] sm:$0x1]
    %v1114 = vperm.slane %v1112, 0
    %v1116 = vrot.slane %v1114, 2
    %v1117 = vrot.slane %v1114, 4
    %v1118 = vrot.slane %v1114, 6
    %v1122 = vadd.f32 %v1104, %v1114
    %v1123 = vadd.f32 %v1105, %v1116
    %v1124 = vadd.f32 %v1106, %v1117
    %v1125 = vadd.f32 %v1107, %v1118
    %v1126 = vadd.f32 %v1108, %v1114
    %v1127 = vadd.f32 %v1109, %v1116
    %v1128 = vadd.f32 %v1110, %v1117
    %v1129 = vadd.f32 %v1111, %v1118
    %1138 = vst [vmem:[#allocation1] ss:$4 sm:$0xff] %v1122
    %s1139 = scalar_lea.vmem [#allocation1], 1
    %1140 = vst [vmem:[%s1139] ss:$4 sm:$0xff] %v1123
    %s1141 = scalar_lea.vmem [#allocation1], 2
    %1142 = vst [vmem:[%s1141] ss:$4 sm:$0xff] %v1124
    %s1143 = scalar_lea.vmem [#allocation1], 3
    %1144 = vst [vmem:[%s1143] ss:$4 sm:$0xff] %v1125
    %s1145 = scalar_lea.vmem [#allocation1], 32
    %1146 = vst [vmem:[%s1145] ss:$4 sm:$0xff] %v1126
    %s1147 = scalar_lea.vmem [#allocation1], 33
    %1148 = vst [vmem:[%s1147] ss:$4 sm:$0xff] %v1127
    %s1149 = scalar_lea.vmem [#allocation1], 34
    %1150 = vst [vmem:[%s1149] ss:$4 sm:$0xff] %v1128
    %s1151 = scalar_lea.vmem [#allocation1], 35
    %1152 = vst [vmem:[%s1151] ss:$4 sm:$0xff] %v1129
    %v1153 = vld.sshfl [vmem:[#allocation1] sm:$0xff pattern:$0x73625140]
    %v1154 = vld.sshfl [vmem:[#allocation1 + $0x20] sm:$0xff pattern:$0x73625140]
    %v1157 = vpack.c.bf16 %v1154, %v1153
    %v1158 = vld [vmem:[#allocation2] sm:$0xf]
    %v1159 = vld [vmem:[#allocation2 + $0x4] sm:$0xf]
    %v1160 = vld [vmem:[#allocation2 + $0x8] sm:$0xf]
    %v1161 = vld [vmem:[#allocation2 + $0xc] sm:$0xf]
    %v1162 = vld [vmem:[%s8] sm:$0x1]
    %v1164 = vperm.slane %v1162, 0
    %v1170 = vunpack.c.l.b16 %v1158
    %v1171 = vunpack.c.l.b16 %v1159
    %v1172 = vunpack.c.l.b16 %v1160
    %v1173 = vunpack.c.l.b16 %v1161
    %v1174 = vpack.c.b16 %v1171, %v1170
    %v1175 = vpack.c.b16 %v1173, %v1172
    %v1179 = vsel %vm118, %v1157, 0
    %1181 = vmatpush.bf16.msra.mxu0 0
    %1182 = vmatpush.bf16.msra.mxu0 0
    %1183 = vmatpush.bf16.msra.mxu0 0
    %1184 = vmatpush.bf16.msra.mxu0 0
    %1185 = vmatpush.bf16.msra.mxu0 0
    %1186 = vmatpush.bf16.msra.mxu0 0
    %1187 = vmatpush.bf16.msra.mxu0 %v1175
    %1188 = vmatpush.bf16.msra.mxu0 %v1174
    %1189 = vmatmul.bf16.gmra.mxu0 %v1179
    %v1190 = vpop.f32.mrf.mxu0
    %v1191 = vadd.f32 %v1164, %v1190
    %v1192 = vpop.f32.mrf.mxu0
    %v1193 = vadd.f32 %v1164, %v1192
    %1194 = vdwg.mxu0
    %v1195 = vmax.f32 %v1191, 0.0
    %v1196 = vmax.f32 %v1193, 0.0
    %v1197 = vpack.c.bf16 %v1196, %v1195
    %v1198 = vld [vmem:[%s9] sm:$0xf]
    %v1199 = vld [vmem:[%s9 + $0x4] sm:$0xf]
    %v1200 = vld [vmem:[%s9 + $0x8] sm:$0xf]
    %v1201 = vld [vmem:[%s9 + $0xc] sm:$0xf]
    %v1202 = vld [vmem:[%s9 + $0x10] sm:$0xf]
    %v1203 = vld [vmem:[%s9 + $0x14] sm:$0xf]
    %v1204 = vld [vmem:[%s9 + $0x18] sm:$0xf]
    %v1205 = vld [vmem:[%s9 + $0x1c] sm:$0xf]
    %v1206 = vld [vmem:[%s10] sm:$0x1]
    %v1208 = vperm.slane %v1206, 0
    %v1218 = vunpack.c.l.b16 %v1198
    %v1219 = vunpack.c.l.b16 %v1199
    %v1220 = vunpack.c.l.b16 %v1200
    %v1221 = vunpack.c.l.b16 %v1201
    %v1222 = vunpack.c.l.b16 %v1202
    %v1223 = vunpack.c.l.b16 %v1203
    %v1224 = vunpack.c.l.b16 %v1204
    %v1225 = vunpack.c.l.b16 %v1205
    %v1226 = vpack.c.b16 %v1219, %v1218
    %v1227 = vpack.c.b16 %v1221, %v1220
    %v1228 = vpack.c.b16 %v1223, %v1222
    %v1229 = vpack.c.b16 %v1225, %v1224
    %vm1234 = vcmask 523264
    %v1236 = vsel %vm1234, %v1197, 0
    %1238 = vmatpush.bf16.msra.mxu0 0
    %1239 = vmatpush.bf16.msra.mxu0 0
    %1240 = vmatpush.bf16.msra.mxu0 0
    %1241 = vmatpush.bf16.msra.mxu0 0
    %1242 = vmatpush.bf16.msra.mxu0 %v1229
    %1243 = vmatpush.bf16.msra.mxu0 %v1228
    %1244 = vmatpush.bf16.msra.mxu0 %v1227
    %1245 = vmatpush.bf16.msra.mxu0 %v1226
    %1246 = vmatmul.bf16.gmra.mxu0 %v1236
    %v1247 = vpop.f32.mrf.mxu0
    %v1248 = vadd.f32 %v1208, %v1247
    %v1249 = vpop.f32.mrf.mxu0
    %v1250 = vadd.f32 %v1208, %v1249
    %1251 = vdwg.mxu0
    %v1254 = vrot.slane %v1248, 2
    %v1255 = vrot.slane %v1248, 4
    %v1256 = vrot.slane %v1248, 6
    %v1257 = vrot.slane %v1250, 2
    %v1258 = vrot.slane %v1250, 4
    %v1259 = vrot.slane %v1250, 6
    %v1266 = vadd.f32 %v1122, %v1248
    %v1267 = vadd.f32 %v1123, %v1254
    %v1268 = vadd.f32 %v1124, %v1255
    %v1269 = vadd.f32 %v1125, %v1256
    %v1270 = vadd.f32 %v1126, %v1250
    %v1271 = vadd.f32 %v1127, %v1257
    %v1272 = vadd.f32 %v1128, %v1258
    %v1273 = vadd.f32 %v1129, %v1259
    %1282 = vst [vmem:[#allocation1] ss:$4 sm:$0xff] %v1266
    %s1283 = scalar_lea.vmem [#allocation1], 1
    %1284 = vst [vmem:[%s1283] ss:$4 sm:$0xff] %v1267
    %s1285 = scalar_lea.vmem [#allocation1], 2
    %1286 = vst [vmem:[%s1285] ss:$4 sm:$0xff] %v1268
    %s1287 = scalar_lea.vmem [#allocation1], 3
    %1288 = vst [vmem:[%s1287] ss:$4 sm:$0xff] %v1269
    %s1289 = scalar_lea.vmem [#allocation1], 32
    %1290 = vst [vmem:[%s1289] ss:$4 sm:$0xff] %v1270
    %s1291 = scalar_lea.vmem [#allocation1], 33
    %1292 = vst [vmem:[%s1291] ss:$4 sm:$0xff] %v1271
    %s1293 = scalar_lea.vmem [#allocation1], 34
    %1294 = vst [vmem:[%s1293] ss:$4 sm:$0xff] %v1272
    %s1295 = scalar_lea.vmem [#allocation1], 35
    %1296 = vst [vmem:[%s1295] ss:$4 sm:$0xff] %v1273
    %v1297 = vld.sshfl [vmem:[#allocation1] sm:$0xff pattern:$0x73625140]
    %v1298 = vld.sshfl [vmem:[#allocation1 + $0x20] sm:$0xff pattern:$0x73625140]
    %v1301 = vsel %vm118, %v1297, 0.0
    %1302 = vadd.xlane.f32.xlu0 %v1301
    %v1303 = vpop.xlane.xlu0 %1302
    %v1304 = vsel %vm118, %v1298, 0.0
    %1305 = vadd.xlane.f32.xlu0 %v1304
    %v1306 = vpop.xlane.xlu0 %1305
    %v1307 = vmul.f32 %v1303, %v926
    %v1308 = vmul.f32 %v1306, %v926
    %v1312 = vunpack.c.l.s4 269488144
    %v1313 = vunpack.c.0.s8 %v1312
    %v1314 = vperm.slane %v1307, %v1313
    %v1316 = vunpack.c.l.s4 842150450
    %v1317 = vunpack.c.0.s8 %v1316
    %v1318 = vperm.slane %v1307, %v1317
    %v1320 = vunpack.c.l.s4 1414812756
    %v1321 = vunpack.c.0.s8 %v1320
    %v1322 = vperm.slane %v1307, %v1321
    %v1324 = vunpack.c.l.s4 1987475062
    %v1325 = vunpack.c.0.s8 %v1324
    %v1326 = vperm.slane %v1307, %v1325
    %v1328 = vunpack.c.l.s4 269488144
    %v1329 = vunpack.c.0.s8 %v1328
    %v1330 = vperm.slane %v1308, %v1329
    %v1332 = vunpack.c.l.s4 842150450
    %v1333 = vunpack.c.0.s8 %v1332
    %v1334 = vperm.slane %v1308, %v1333
    %v1336 = vunpack.c.l.s4 1414812756
    %v1337 = vunpack.c.0.s8 %v1336
    %v1338 = vperm.slane %v1308, %v1337
    %v1340 = vunpack.c.l.s4 1987475062
    %v1341 = vunpack.c.0.s8 %v1340
    %v1342 = vperm.slane %v1308, %v1341
    %v1351 = vsub.f32 %v1266, %v1314
    %v1352 = vsub.f32 %v1267, %v1318
    %v1353 = vsub.f32 %v1268, %v1322
    %v1354 = vsub.f32 %v1269, %v1326
    %v1355 = vsub.f32 %v1270, %v1330
    %v1356 = vsub.f32 %v1271, %v1334
    %v1357 = vsub.f32 %v1272, %v1338
    %v1358 = vsub.f32 %v1273, %v1342
    %v1359 = vmul.f32 %v1351, %v1351
    %v1360 = vmul.f32 %v1352, %v1352
    %v1361 = vmul.f32 %v1353, %v1353
    %v1362 = vmul.f32 %v1354, %v1354
    %v1363 = vmul.f32 %v1355, %v1355
    %v1364 = vmul.f32 %v1356, %v1356
    %v1365 = vmul.f32 %v1357, %v1357
    %v1366 = vmul.f32 %v1358, %v1358
    %1375 = vst [vmem:[#allocation1] ss:$4 sm:$0xff] %v1359
    %s1376 = scalar_lea.vmem [#allocation1], 1
    %1377 = vst [vmem:[%s1376] ss:$4 sm:$0xff] %v1360
    %s1378 = scalar_lea.vmem [#allocation1], 2
    %1379 = vst [vmem:[%s1378] ss:$4 sm:$0xff] %v1361
    %s1380 = scalar_lea.vmem [#allocation1], 3
    %1381 = vst [vmem:[%s1380] ss:$4 sm:$0xff] %v1362
    %s1382 = scalar_lea.vmem [#allocation1], 32
    %1383 = vst [vmem:[%s1382] ss:$4 sm:$0xff] %v1363
    %s1384 = scalar_lea.vmem [#allocation1], 33
    %1385 = vst [vmem:[%s1384] ss:$4 sm:$0xff] %v1364
    %s1386 = scalar_lea.vmem [#allocation1], 34
    %1387 = vst [vmem:[%s1386] ss:$4 sm:$0xff] %v1365
    %s1388 = scalar_lea.vmem [#allocation1], 35
    %1389 = vst [vmem:[%s1388] ss:$4 sm:$0xff] %v1366
    %v1390 = vld.sshfl [vmem:[#allocation1] sm:$0xff pattern:$0x73625140]
    %v1391 = vld.sshfl [vmem:[#allocation1 + $0x20] sm:$0xff pattern:$0x73625140]
    %v1394 = vsel %vm118, %v1390, 0.0
    %1395 = vadd.xlane.f32.xlu0 %v1394
    %v1396 = vpop.xlane.xlu0 %1395
    %v1397 = vsel %vm118, %v1391, 0.0
    %1398 = vadd.xlane.f32.xlu0 %v1397
    %v1399 = vpop.xlane.xlu0 %1398
    %v1400 = vmul.f32 %v1396, %v926
    %v1401 = vmul.f32 %v1399, %v926
    %v1402 = vadd.f32 %v1400, 1e-05
    %v1403 = vadd.f32 %v1401, 1e-05
    %v1404 = vrsqrt.pop %v1402
    %v1405 = vmul.f32 %v1404, %v1402
    %v1406 = vmul.f32 %v1405, %v1404
    %v1407 = vmul.f32 0.5, %v1406
    %v1408 = vsub.f32 1.5, %v1407
    %v1409 = vmul.f32 %v1404, %v1408
    %vm1410 = vweird.f32 %v1402
    %vm1411 = vweird.f32 %v1404
    %vm1412 = vmor %vm1410, %vm1411
    %v1413 = vsel %vm1412, %v1404, %v1409
    %v1414 = vrsqrt.pop %v1403
    %v1415 = vmul.f32 %v1414, %v1403
    %v1416 = vmul.f32 %v1415, %v1414
    %v1417 = vmul.f32 0.5, %v1416
    %v1418 = vsub.f32 1.5, %v1417
    %v1419 = vmul.f32 %v1414, %v1418
    %vm1420 = vweird.f32 %v1403
    %vm1421 = vweird.f32 %v1414
    %vm1422 = vmor %vm1420, %vm1421
    %v1423 = vsel %vm1422, %v1414, %v1419
    %v1427 = vunpack.c.l.s4 269488144
    %v1428 = vunpack.c.0.s8 %v1427
    %v1429 = vperm.slane %v1413, %v1428
    %v1431 = vunpack.c.l.s4 842150450
    %v1432 = vunpack.c.0.s8 %v1431
    %v1433 = vperm.slane %v1413, %v1432
    %v1435 = vunpack.c.l.s4 1414812756
    %v1436 = vunpack.c.0.s8 %v1435
    %v1437 = vperm.slane %v1413, %v1436
    %v1439 = vunpack.c.l.s4 1987475062
    %v1440 = vunpack.c.0.s8 %v1439
    %v1441 = vperm.slane %v1413, %v1440
    %v1443 = vunpack.c.l.s4 269488144
    %v1444 = vunpack.c.0.s8 %v1443
    %v1445 = vperm.slane %v1423, %v1444
    %v1447 = vunpack.c.l.s4 842150450
    %v1448 = vunpack.c.0.s8 %v1447
    %v1449 = vperm.slane %v1423, %v1448
    %v1451 = vunpack.c.l.s4 1414812756
    %v1452 = vunpack.c.0.s8 %v1451
    %v1453 = vperm.slane %v1423, %v1452
    %v1455 = vunpack.c.l.s4 1987475062
    %v1456 = vunpack.c.0.s8 %v1455
    %v1457 = vperm.slane %v1423, %v1456
    %v1466 = vmul.f32 %v1351, %v1429
    %v1467 = vmul.f32 %v1352, %v1433
    %v1468 = vmul.f32 %v1353, %v1437
    %v1469 = vmul.f32 %v1354, %v1441
    %v1470 = vmul.f32 %v1355, %v1445
    %v1471 = vmul.f32 %v1356, %v1449
    %v1472 = vmul.f32 %v1357, %v1453
    %v1473 = vmul.f32 %v1358, %v1457
    %v1474 = vld [vmem:[%s11] sm:$0x1]
    %v1476 = vperm.slane %v1474, 0
    %v1478 = vrot.slane %v1476, 2
    %v1479 = vrot.slane %v1476, 4
    %v1480 = vrot.slane %v1476, 6
    %v1484 = vmul.f32 %v1466, %v1476
    %v1485 = vmul.f32 %v1467, %v1478
    %v1486 = vmul.f32 %v1468, %v1479
    %v1487 = vmul.f32 %v1469, %v1480
    %v1488 = vmul.f32 %v1470, %v1476
    %v1489 = vmul.f32 %v1471, %v1478
    %v1490 = vmul.f32 %v1472, %v1479
    %v1491 = vmul.f32 %v1473, %v1480
    %v1492 = vld [vmem:[%s12] sm:$0x1]
    %v1494 = vperm.slane %v1492, 0
    %v1496 = vrot.slane %v1494, 2
    %v1497 = vrot.slane %v1494, 4
    %v1498 = vrot.slane %v1494, 6
    %v1502 = vadd.f32 %v1484, %v1494
    %v1503 = vadd.f32 %v1485, %v1496
    %v1504 = vadd.f32 %v1486, %v1497
    %v1505 = vadd.f32 %v1487, %v1498
    %v1506 = vadd.f32 %v1488, %v1494
    %v1507 = vadd.f32 %v1489, %v1496
    %v1508 = vadd.f32 %v1490, %v1497
    %v1509 = vadd.f32 %v1491, %v1498
    %vm1510 = vcmask 254976
    %1511 = vst.msk [vmem:[#allocation5] sm:$0x3] %vm1510, %v1502
    %1512 = vst.msk [vmem:[#allocation5 + $0x2] sm:$0x3] %vm1510, %v1503
    %1513 = vst.msk [vmem:[#allocation5 + $0x4] sm:$0x3] %vm1510, %v1504
    %1514 = vst.msk [vmem:[#allocation5 + $0x6] sm:$0x3] %vm1510, %v1505
    %1515 = vst.msk [vmem:[#allocation5 + $0x8] sm:$0x3] %vm1510, %v1506
    %1516 = vst.msk [vmem:[#allocation5 + $0xa] sm:$0x3] %vm1510, %v1507
    %1517 = vst.msk [vmem:[#allocation5 + $0xc] sm:$0x3] %vm1510, %v1508
    %1518 = vst.msk [vmem:[#allocation5 + $0xe] sm:$0x3] %vm1510, %v1509
    // Predicated region
    $region58: #{tpu_custom_call.1} parent=1 // pred_check
      _
    $region59: #{tpu_custom_call.1} parent=1 // pred_check_branch
      %1520 = sbr.rel (0) target = $region61
    $region60: #{tpu_custom_call.1} parent=1 // pred_region
      %1522 = vsyncadd [#allocation4], 0
      %s1523 = sshll.u32 [#allocation5], 4
      %s1524 = int_to_ptr.vmem [resolvable:$true] %s1523
      %s1525 = sshll.u32 %s13, 4
      %s1526 = int_to_ptr.hbm [resolvable:$true] %s1525
      %1531 = dma.vmem_to_hbm [thread:$0]  %s1524, 256, %s1526, [#allocation4], 32, 32, 2
    $region61: #{tpu_custom_call.1} parent=1 // pred_fallthru
      _
    // Predicated region
    $region62: #{tpu_custom_call.1} parent=1 // pred_check
      _
    $region63: #{tpu_custom_call.1} parent=1 // pred_check_branch
      %1533 = sbr.rel (0) target = $region65
    $region64: #{tpu_custom_call.1} parent=1 // pred_region
      %1535 = dma.done [#allocation4], 256
    $region65: #{tpu_custom_call.1} parent=1 // pred_fallthru
      _
    %1536 = vsyncpa [#allocation3], 1
    %1537 = vsyncpa [#allocation4], 1

</llo_original>
